<compile_context>
chip_gen: v7x
topology: tpu7x:2x2x1
jax: 0.10.0
libtpu: 0.0.40
codegen_flags: <defaults>
</compile_context>

<pallas_src>
import numpy as np
import jax
import jax.numpy as jnp
from jax.experimental import pallas as pl
from jax.experimental.pallas import tpu as pltpu

H_IN, W_IN = 7, 6      # input spatial size (fixed by the architecture)
H1, W1 = 4, 3          # conv1 'valid' output
H2, W2 = 3, 2          # conv2 'valid' output
H3, W3 = 2, 1          # conv3 'valid' output
C = 64                 # conv channel width
IN_PAD = 128           # lane-dense padded input features (42 real + 1 const + 0s)
OUT_PAD = 128          # lane-dense padded logits (true outputs = 7)
NEG_SLOPE = 0.1
SUB = 16               # bf16 sublane packing: keep batch tiles multiples of 16


def _leaky(a):
    # maximum-form LeakyReLU: mul+max (2 VALU ops) instead of cmp+select+mul.
    return jnp.maximum(a, NEG_SLOPE * a)


def pycnn_kernel(x_ref, w1_ref, w2_ref, b2_ref, w3_ref, b3_ref,
                 wl1_ref, bl1_ref, wo_ref, out_ref):
    bf16 = jnp.bfloat16
    x = x_ref[...]                                              # (TB, 128) bf16
    # conv1 folded to one matmul; bias rides the constant-1 input lane (row 42).
    y1 = _leaky(jnp.dot(x, w1_ref[...],
                        preferred_element_type=jnp.float32).astype(bf16))
    # conv2 folded: (TB,768) @ (768,384); bf16 bias + LeakyReLU epilogue.
    y2 = _leaky(jnp.dot(y1, w2_ref[...],
                        preferred_element_type=jnp.float32).astype(bf16)
                + b2_ref[...])
    # conv3 folded: (TB,384) @ (384,128).
    y3 = _leaky(jnp.dot(y2, w3_ref[...],
                        preferred_element_type=jnp.float32).astype(bf16)
                + b3_ref[...])
    # linear1 padded to 128 output lanes; lane 64 becomes a constant 1 that
    # carries the output head's bias through the last matmul.
    z = _leaky(jnp.dot(y3, wl1_ref[...],
                       preferred_element_type=jnp.float32).astype(bf16)
               + bl1_ref[...])
    # out head: (TB,128) @ (128,128); bias already folded via z[:,64] == 1.
    out_ref[...] = jnp.dot(z, wo_ref[...],
                           preferred_element_type=jnp.float32).astype(bf16)


def pycnn_forward(x, kparams, tb=1024):
    """x: (N, 1, 7, 6) or (N, 7, 6) f32.  kparams: host-packed kernel params."""
    if x.ndim == 4:
        x = x[:, 0]
    n = x.shape[0]

    # --- batch tile selection ------------------------------------------------
    n16 = -(-n // SUB) * SUB                     # batch rounded to bf16 sublanes
    tb = int(min(tb, n16))
    # v7x megacore: the "parallel" batch axis is what the two TensorCores
    # split, so keep >= 2 grid steps whenever the batch is big enough.
    if n16 >= 2 * SUB:
        tb = min(tb, -(-n16 // (2 * SUB)) * SUB)
    tb = max(SUB, tb)
    n_pad = -(-n // tb) * tb

    # --- host-side input prep: bf16, lane-dense 42 -> 128, constant-1 lane ---
    x_flat = x.reshape(n, H_IN * W_IN).astype(jnp.float32)
    x_pad = jnp.concatenate(
        [x_flat,
         jnp.ones((n, 1), jnp.float32),                          # conv1 bias lane
         jnp.zeros((n, IN_PAD - H_IN * W_IN - 1), jnp.float32)], axis=1)
    x_pad = x_pad.astype(jnp.bfloat16)
    if n_pad != n:
        x_pad = jnp.pad(x_pad, ((0, n_pad - n), (0, 0)))

    in_specs = [pl.BlockSpec((tb, IN_PAD), lambda i: (i, 0))]
    # Weights/biases: whole-array VMEM blocks with a constant (0,0) index_map,
    # so they stay resident across the grid (no per-step re-DMA).
    for p in kparams:
        in_specs.append(pl.BlockSpec(p.shape, lambda i: (0, 0)))

    out = pl.pallas_call(
        pycnn_kernel,
        out_shape=jax.ShapeDtypeStruct((n_pad, OUT_PAD), jnp.bfloat16),
        grid_spec=pl.GridSpec(
            grid=(n_pad // tb,),
            in_specs=in_specs,
            out_specs=pl.BlockSpec((tb, OUT_PAD), lambda i: (i, 0)),
        ),
        compiler_params=pltpu.CompilerParams(
            dimension_semantics=("parallel",),
            # Headroom for large batch tiles (v5e's default scoped limit is
            # 16 MiB); still well under v7x's 64 MiB physical VMEM.
            vmem_limit_bytes=48 * 1024 * 1024),
    )(x_pad, *kparams)
    # Real logits are the first 7 lanes; return f32 like the PyTorch module.
    return out[:n, :7].astype(jnp.float32)


def reference_forward(x_nchw, tparams):
    """Pure-JAX f32 reference with PyTorch (NCHW / OIHW) semantics."""
    w1_t, b1, w2_t, b2, w3_t, b3, wl1_t, bl1, wo_t, bo = tparams

    def conv(x, w, b):
        y = jax.lax.conv_general_dilated(
            x, w, window_strides=(1, 1), padding='VALID',
            dimension_numbers=('NCHW', 'OIHW', 'NCHW'))
        return y + b.reshape(1, -1, 1, 1)

    def leaky(a):
        return jnp.where(a > 0, a, NEG_SLOPE * a)

    y = leaky(conv(x_nchw, w1_t, b1))
    y = leaky(conv(y, w2_t, b2))
    y = leaky(conv(y, w3_t, b3))
    f = y.reshape(-1, 2 * C)                 # same as torch .view(-1, 2*64)
    z = leaky(f @ wl1_t.T + bl1)
    return z @ wo_t.T + bo


def make_params(key):
    """Deterministic synthetic parameters in PyTorch layouts."""
    ks = jax.random.split(key, 10)
    s = 0.1
    w1_t = s * jax.random.normal(ks[0], (C, 1, 4, 4), jnp.float32)
    b1 = s * jax.random.normal(ks[1], (C,), jnp.float32)
    w2_t = s * jax.random.normal(ks[2], (C, C, 2, 2), jnp.float32)
    b2 = s * jax.random.normal(ks[3], (C,), jnp.float32)
    w3_t = s * jax.random.normal(ks[4], (C, C, 2, 2), jnp.float32)
    b3 = s * jax.random.normal(ks[5], (C,), jnp.float32)
    wl1_t = s * jax.random.normal(ks[6], (C, 2 * C), jnp.float32)
    bl1 = s * jax.random.normal(ks[7], (C,), jnp.float32)
    wo_t = s * jax.random.normal(ks[8], (7, C), jnp.float32)
    bo = s * jax.random.normal(ks[9], (7,), jnp.float32)
    return [w1_t, b1, w2_t, b2, w3_t, b3, wl1_t, bl1, wo_t, bo]


def to_kernel_params(tparams):
    """One-time host-side packing: fold each tiny conv into a dense matmul."""
    w1_t, b1, w2_t, b2, w3_t, b3, wl1_t, bl1, wo_t, bo = [
        np.asarray(p) for p in tparams]

    # conv1 (1->64, k=4) as a (128 -> 12*64) matmul.  Rows 0..41 are the 7x6
    # pixels, row 42 multiplies the constant-1 input lane and carries conv1's
    # bias, rows 43..127 are zero (input pad lanes).
    w1_big = np.zeros((IN_PAD, H1 * W1 * C), np.float32)
    for oy in range(H1):
        for ox in range(W1):
            p = oy * W1 + ox
            for dy in range(4):
                for dx in range(4):
                    w1_big[(oy + dy) * W_IN + (ox + dx),
                           p * C:(p + 1) * C] = w1_t[:, 0, dy, dx]
            w1_big[H_IN * W_IN, p * C:(p + 1) * C] = b1   # bias via const-1 lane

    # conv2 (64->64, k=2) as a (12*64 -> 6*64) matmul.
    w2_big = np.zeros((H1 * W1 * C, H2 * W2 * C), np.float32)
    for oy in range(H2):
        for ox in range(W2):
            q = oy * W2 + ox
            for dy in range(2):
                for dx in range(2):
                    p = (oy + dy) * W1 + (ox + dx)
                    w2_big[p * C:(p + 1) * C,
                           q * C:(q + 1) * C] = w2_t[:, :, dy, dx].T
    b2_big = np.tile(b2, H2 * W2)[None, :].astype(np.float32)

    # conv3 (64->64, k=2) as a (6*64 -> 2*64) matmul.
    w3_big = np.zeros((H2 * W2 * C, H3 * W3 * C), np.float32)
    for oy in range(H3):
        for ox in range(W3):
            r = oy * W3 + ox
            for dy in range(2):
                for dx in range(2):
                    p = (oy + dy) * W2 + (ox + dx)
                    w3_big[p * C:(p + 1) * C,
                           r * C:(r + 1) * C] = w3_t[:, :, dy, dx].T
    b3_big = np.tile(b3, H3 * W3)[None, :].astype(np.float32)

    # Kernel flattens conv3 output as g = r*64 + c; torch's view gives f = c*2 + r.
    perm = np.array([(g % C) * (H3 * W3) + (g // C) for g in range(H3 * W3 * C)])
    # linear1 padded to a full (128,128) GEMM.  Column 64's weights are zero and
    # its bias is 1.0, so after LeakyReLU z[:,64] == 1 and carries the out bias.
    wl1_pad = np.zeros((2 * C, 2 * C), np.float32)
    wl1_pad[:, :C] = np.transpose(wl1_t)[perm, :]
    bl1_pad = np.zeros((1, 2 * C), np.float32)
    bl1_pad[0, :C] = bl1
    bl1_pad[0, C] = 1.0                                   # constant-1 lane

    # out head padded to a full (128,128) GEMM; row 64 carries the out bias.
    wo_pad = np.zeros((2 * C, OUT_PAD), np.float32)
    wo_pad[:C, :7] = np.transpose(wo_t)
    wo_pad[C, :7] = bo
    # rows 65..127 see zero activations (wl1 pad) -> contribute nothing.

    bf16 = jnp.bfloat16
    return [jnp.asarray(w1_big, bf16),
            jnp.asarray(w2_big, bf16), jnp.asarray(b2_big, bf16),
            jnp.asarray(w3_big, bf16), jnp.asarray(b3_big, bf16),
            jnp.asarray(wl1_pad, bf16), jnp.asarray(bl1_pad, bf16),
            jnp.asarray(wo_pad, bf16)]


if __name__ == "__main__":
    key = jax.random.PRNGKey(0)
    kx, kp = jax.random.split(key)

    batch = 2
    x_nchw = jax.random.normal(kx, (batch, 1, H_IN, W_IN), jnp.float32)
    tparams = make_params(kp)
    kparams = to_kernel_params(tparams)

    out = pycnn_forward(x_nchw, kparams)
    out = jax.block_until_ready(out)

    ref = reference_forward(x_nchw, tparams)
    ref = jax.block_until_ready(ref)

    assert out.shape == (batch, 7), out.shape
    # bf16 weights/activations/epilogue (f32 MXU accumulation) vs pure-f32
    # reference -> loosened tolerance.
    assert jnp.allclose(out, ref, atol=7.5e-2, rtol=7.5e-2), (out, ref)
    print("KERNEL_OK")
</pallas_src>

<mosaic_0001>
module attributes {stable_mosaic.version = 11 : i64} {
  func.func @pycnn_kernel(%arg0: i32, %arg1: memref<16x128xbf16, #tpu.memory_space<vmem>>, %arg2: memref<128x768xbf16, #tpu.memory_space<vmem>>, %arg3: memref<768x384xbf16, #tpu.memory_space<vmem>>, %arg4: memref<1x384xbf16, #tpu.memory_space<vmem>>, %arg5: memref<384x128xbf16, #tpu.memory_space<vmem>>, %arg6: memref<1x128xbf16, #tpu.memory_space<vmem>>, %arg7: memref<128x128xbf16, #tpu.memory_space<vmem>>, %arg8: memref<1x128xbf16, #tpu.memory_space<vmem>>, %arg9: memref<128x128xbf16, #tpu.memory_space<vmem>>, %arg10: memref<16x128xbf16, #tpu.memory_space<vmem>>) attributes {dimension_semantics = [#tpu.dimension_semantics<parallel>], iteration_bounds = array<i64: 1>, scalar_prefetch = 0 : i64, scratch_operands = 0 : i64, tpu.core_type = #tpu.core_type<tc>, window_params = [{transform_indices = @transform_0, window_bounds = array<i64: 16, 128>}, {pipeline_mode = #tpu.pipeline_mode<synchronous>, transform_indices = @transform_1, window_bounds = array<i64: 128, 768>}, {pipeline_mode = #tpu.pipeline_mode<synchronous>, transform_indices = @transform_2, window_bounds = array<i64: 768, 384>}, {pipeline_mode = #tpu.pipeline_mode<synchronous>, transform_indices = @transform_3, window_bounds = array<i64: 1, 384>}, {pipeline_mode = #tpu.pipeline_mode<synchronous>, transform_indices = @transform_4, window_bounds = array<i64: 384, 128>}, {pipeline_mode = #tpu.pipeline_mode<synchronous>, transform_indices = @transform_5, window_bounds = array<i64: 1, 128>}, {pipeline_mode = #tpu.pipeline_mode<synchronous>, transform_indices = @transform_6, window_bounds = array<i64: 128, 128>}, {pipeline_mode = #tpu.pipeline_mode<synchronous>, transform_indices = @transform_7, window_bounds = array<i64: 1, 128>}, {pipeline_mode = #tpu.pipeline_mode<synchronous>, transform_indices = @transform_8, window_bounds = array<i64: 128, 128>}, {transform_indices = @transform_9, window_bounds = array<i64: 16, 128>}]} {
    %c0 = arith.constant 0 : index
    %c0_0 = arith.constant 0 : index
    %0 = vector.load %arg1[%c0, %c0_0] : memref<16x128xbf16, #tpu.memory_space<vmem>>, vector<16x128xbf16>
    %c0_1 = arith.constant 0 : index
    %c0_2 = arith.constant 0 : index
    %1 = vector.load %arg2[%c0_1, %c0_2] : memref<128x768xbf16, #tpu.memory_space<vmem>>, vector<128x768xbf16>
    %cst = arith.constant dense<0.000000e+00> : vector<16x768xf32>
    %2 = tpu.matmul %0, %1, %cst {dimension_numbers = #tpu.dot_dimension_numbers<[1], [0], [0], [1], [0, 0, 1, 1], [], []>} : vector<16x128xbf16>, vector<128x768xbf16>, vector<16x768xf32> -> vector<16x768xf32>
    %3 = arith.truncf %2 : vector<16x768xf32> to vector<16x768xbf16>
    %cst_3 = arith.constant 1.000980e-01 : bf16
    %4 = vector.broadcast %cst_3 : bf16 to vector<16x768xbf16>
    %5 = arith.mulf %4, %3 : vector<16x768xbf16>
    %6 = arith.maximumf %3, %5 : vector<16x768xbf16>
    %c0_4 = arith.constant 0 : index
    %c0_5 = arith.constant 0 : index
    %7 = vector.load %arg3[%c0_4, %c0_5] : memref<768x384xbf16, #tpu.memory_space<vmem>>, vector<768x384xbf16>
    %cst_6 = arith.constant dense<0.000000e+00> : vector<16x384xf32>
    %8 = tpu.matmul %6, %7, %cst_6 {dimension_numbers = #tpu.dot_dimension_numbers<[1], [0], [0], [1], [0, 0, 1, 1], [], []>} : vector<16x768xbf16>, vector<768x384xbf16>, vector<16x384xf32> -> vector<16x384xf32>
    %9 = arith.truncf %8 : vector<16x384xf32> to vector<16x384xbf16>
    %c0_7 = arith.constant 0 : index
    %c0_8 = arith.constant 0 : index
    %10 = vector.load %arg4[%c0_7, %c0_8] : memref<1x384xbf16, #tpu.memory_space<vmem>>, vector<1x384xbf16>
    %11 = vector.broadcast %10 : vector<1x384xbf16> to vector<16x384xbf16>
    %12 = arith.addf %9, %11 : vector<16x384xbf16>
    %cst_9 = arith.constant 1.000980e-01 : bf16
    %13 = vector.broadcast %cst_9 : bf16 to vector<16x384xbf16>
    %14 = arith.mulf %13, %12 : vector<16x384xbf16>
    %15 = arith.maximumf %12, %14 : vector<16x384xbf16>
    %c0_10 = arith.constant 0 : index
    %c0_11 = arith.constant 0 : index
    %16 = vector.load %arg5[%c0_10, %c0_11] : memref<384x128xbf16, #tpu.memory_space<vmem>>, vector<384x128xbf16>
    %cst_12 = arith.constant dense<0.000000e+00> : vector<16x128xf32>
    %17 = tpu.matmul %15, %16, %cst_12 {dimension_numbers = #tpu.dot_dimension_numbers<[1], [0], [0], [1], [0, 0, 1, 1], [], []>} : vector<16x384xbf16>, vector<384x128xbf16>, vector<16x128xf32> -> vector<16x128xf32>
    %18 = arith.truncf %17 : vector<16x128xf32> to vector<16x128xbf16>
    %c0_13 = arith.constant 0 : index
    %c0_14 = arith.constant 0 : index
    %19 = vector.load %arg6[%c0_13, %c0_14] : memref<1x128xbf16, #tpu.memory_space<vmem>>, vector<1x128xbf16>
    %20 = vector.broadcast %19 : vector<1x128xbf16> to vector<16x128xbf16>
    %21 = arith.addf %18, %20 : vector<16x128xbf16>
    %cst_15 = arith.constant 1.000980e-01 : bf16
    %22 = vector.broadcast %cst_15 : bf16 to vector<16x128xbf16>
    %23 = arith.mulf %22, %21 : vector<16x128xbf16>
    %24 = arith.maximumf %21, %23 : vector<16x128xbf16>
    %c0_16 = arith.constant 0 : index
    %c0_17 = arith.constant 0 : index
    %25 = vector.load %arg7[%c0_16, %c0_17] : memref<128x128xbf16, #tpu.memory_space<vmem>>, vector<128x128xbf16>
    %cst_18 = arith.constant dense<0.000000e+00> : vector<16x128xf32>
    %26 = tpu.matmul %24, %25, %cst_18 {dimension_numbers = #tpu.dot_dimension_numbers<[1], [0], [0], [1], [0, 0, 1, 1], [], []>} : vector<16x128xbf16>, vector<128x128xbf16>, vector<16x128xf32> -> vector<16x128xf32>
    %27 = arith.truncf %26 : vector<16x128xf32> to vector<16x128xbf16>
    %c0_19 = arith.constant 0 : index
    %c0_20 = arith.constant 0 : index
    %28 = vector.load %arg8[%c0_19, %c0_20] : memref<1x128xbf16, #tpu.memory_space<vmem>>, vector<1x128xbf16>
    %29 = vector.broadcast %28 : vector<1x128xbf16> to vector<16x128xbf16>
    %30 = arith.addf %27, %29 : vector<16x128xbf16>
    %cst_21 = arith.constant 1.000980e-01 : bf16
    %31 = vector.broadcast %cst_21 : bf16 to vector<16x128xbf16>
    %32 = arith.mulf %31, %30 : vector<16x128xbf16>
    %33 = arith.maximumf %30, %32 : vector<16x128xbf16>
    %c0_22 = arith.constant 0 : index
    %c0_23 = arith.constant 0 : index
    %34 = vector.load %arg9[%c0_22, %c0_23] : memref<128x128xbf16, #tpu.memory_space<vmem>>, vector<128x128xbf16>
    %cst_24 = arith.constant dense<0.000000e+00> : vector<16x128xf32>
    %35 = tpu.matmul %33, %34, %cst_24 {dimension_numbers = #tpu.dot_dimension_numbers<[1], [0], [0], [1], [0, 0, 1, 1], [], []>} : vector<16x128xbf16>, vector<128x128xbf16>, vector<16x128xf32> -> vector<16x128xf32>
    %36 = arith.truncf %35 : vector<16x128xf32> to vector<16x128xbf16>
    %c0_25 = arith.constant 0 : index
    %c0_26 = arith.constant 0 : index
    %37 = vector.load %arg10[%c0_25, %c0_26] : memref<16x128xbf16, #tpu.memory_space<vmem>>, vector<16x128xbf16>
    tpu.vector_store %arg10[%c0_25, %c0_26], %36 {strides = array<i32>} : memref<16x128xbf16, #tpu.memory_space<vmem>>, vector<16x128xbf16>,
    return
  }
  func.func @transform_0(%arg0: i32) -> (i32, i32) {
    %c0_i32 = arith.constant 0 : i32
    %c0_i32_0 = arith.constant 0 : i32
    return %arg0, %c0_i32 : i32, i32
  }
  func.func @transform_1(%arg0: i32) -> (i32, i32) {
    %c0_i32 = arith.constant 0 : i32
    %c0_i32_0 = arith.constant 0 : i32
    %c0_i32_1 = arith.constant 0 : i32
    return %c0_i32, %c0_i32_0 : i32, i32
  }
  func.func @transform_2(%arg0: i32) -> (i32, i32) {
    %c0_i32 = arith.constant 0 : i32
    %c0_i32_0 = arith.constant 0 : i32
    %c0_i32_1 = arith.constant 0 : i32
    return %c0_i32, %c0_i32_0 : i32, i32
  }
  func.func @transform_3(%arg0: i32) -> (i32, i32) {
    %c0_i32 = arith.constant 0 : i32
    %c0_i32_0 = arith.constant 0 : i32
    %c0_i32_1 = arith.constant 0 : i32
    return %c0_i32, %c0_i32_0 : i32, i32
  }
  func.func @transform_4(%arg0: i32) -> (i32, i32) {
    %c0_i32 = arith.constant 0 : i32
    %c0_i32_0 = arith.constant 0 : i32
    %c0_i32_1 = arith.constant 0 : i32
    return %c0_i32, %c0_i32_0 : i32, i32
  }
  func.func @transform_5(%arg0: i32) -> (i32, i32) {
    %c0_i32 = arith.constant 0 : i32
    %c0_i32_0 = arith.constant 0 : i32
    %c0_i32_1 = arith.constant 0 : i32
    return %c0_i32, %c0_i32_0 : i32, i32
  }
  func.func @transform_6(%arg0: i32) -> (i32, i32) {
    %c0_i32 = arith.constant 0 : i32
    %c0_i32_0 = arith.constant 0 : i32
    %c0_i32_1 = arith.constant 0 : i32
    return %c0_i32, %c0_i32_0 : i32, i32
  }
  func.func @transform_7(%arg0: i32) -> (i32, i32) {
    %c0_i32 = arith.constant 0 : i32
    %c0_i32_0 = arith.constant 0 : i32
    %c0_i32_1 = arith.constant 0 : i32
    return %c0_i32, %c0_i32_0 : i32, i32
  }
  func.func @transform_8(%arg0: i32) -> (i32, i32) {
    %c0_i32 = arith.constant 0 : i32
    %c0_i32_0 = arith.constant 0 : i32
    %c0_i32_1 = arith.constant 0 : i32
    return %c0_i32, %c0_i32_0 : i32, i32
  }
  func.func @transform_9(%arg0: i32) -> (i32, i32) {
    %c0_i32 = arith.constant 0 : i32
    %c0_i32_0 = arith.constant 0 : i32
    return %arg0, %c0_i32 : i32, i32
  }
}

</mosaic_0001>

<llo_original>
// kernel: tpu_custom_call.1
$region0: #{tpu_custom_call.1}
  #allocation0 [shape = 'u32[]', space=smem, size = 0x4, offset = 0x4, fixed_abs, tag = 'smem constant byte address 0x4 - core index']
  #allocation1 [shape = 'u32[144,128]{1,0:T(1,128)}', space=vmem, size = 0x12000, scoped, tag = 'internal scratch']
  %s0 = inlined_call_operand.hbm [shape: bf16[16,128], index: 0, kind: input, shape index: {}]
  %s1 = inlined_call_operand.hbm [shape: bf16[128,768], index: 1, kind: input, shape index: {}]
  %s2 = inlined_call_operand.hbm [shape: bf16[768,384], index: 2, kind: input, shape index: {}]
  %s3 = inlined_call_operand.vmem [shape: bf16[1,384], index: 3, kind: input, shape index: {}]
  %s4 = inlined_call_operand.hbm [shape: bf16[384,128], index: 4, kind: input, shape index: {}]
  %s5 = inlined_call_operand.vmem [shape: bf16[1,128], index: 5, kind: input, shape index: {}]
  %s6 = inlined_call_operand.hbm [shape: bf16[128,128], index: 6, kind: input, shape index: {}]
  %s7 = inlined_call_operand.vmem [shape: bf16[1,128], index: 7, kind: input, shape index: {}]
  %s8 = inlined_call_operand.hbm [shape: bf16[128,128], index: 8, kind: input, shape index: {}]
  %s9 = inlined_call_operand.hbm [shape: bf16[16,128], index: 9, kind: output, shape index: {}]
  %s10 = sld [smem:[#allocation0]]
  $region70: #{tpu_custom_call.1} parent=0
    _
  %s12 = ssub.s32 1, %s10
  %s13 = scalar_select 0, %s12, %s10
  $region1: #{tpu_custom_call.1} parent=0
    #allocation2 [shape = 'u8[4096]{0}', space=vmem, size = 0x1000, scoped, tag = 'input window, operand 0, single buffered']
    #allocation3 [shape = 's32[1]{0}', space=sflag, size = 0x4, scoped, tag = 'scoped memory for tpu_custom_call.1']
    #allocation4 [shape = 's32[1]{0}', space=sflag, size = 0x4, scoped, tag = 'scoped memory for tpu_custom_call.1']
    #allocation5 [shape = 'u8[196608]{0}', space=vmem, size = 0x30000, scoped, tag = 'input window, operand 1, single buffered']
    #allocation6 [shape = 's32[1]{0}', space=sflag, size = 0x4, scoped, tag = 'scoped memory for tpu_custom_call.1']
    #allocation7 [shape = 'u8[589824]{0}', space=vmem, size = 0x90000, scoped, tag = 'input window, operand 2, single buffered']
    #allocation8 [shape = 'u8[98304]{0}', space=vmem, size = 0x18000, scoped, tag = 'input window, operand 4, single buffered']
    #allocation9 [shape = 's32[1]{0}', space=sflag, size = 0x4, scoped, tag = 'scoped memory for tpu_custom_call.1']
    #allocation10 [shape = 'u8[32768]{0}', space=vmem, size = 0x8000, scoped, tag = 'input window, operand 6, single buffered']
    #allocation11 [shape = 'u8[32768]{0}', space=vmem, size = 0x8000, scoped, tag = 'input window, operand 8, single buffered']
    #allocation12 [shape = 's32[1]{0}', space=sflag, size = 0x4, scoped, tag = 'scoped memory for tpu_custom_call.1']
    #allocation13 [shape = 'u8[4096]{0}', space=vmem, size = 0x1000, scoped, tag = 'output window, operand 0, single buffered']
    %14 = vsyncpa [#allocation3], 0
    %15 = vsyncpa [#allocation6], 0
    %16 = vsyncpa [#allocation9], 0
    %17 = vsyncpa [#allocation12], 0
    %18 = vsyncpa [#allocation4], 0
    // Predicated region
    $region2: #{tpu_custom_call.1} parent=1 // pred_check
      _
    $region3: #{tpu_custom_call.1} parent=1 // pred_check_branch
      %20 = sbr.rel (0) target = $region5
    $region4: #{tpu_custom_call.1} parent=1 // pred_region
      %s22 = ssub.s32 128, 128
      %23 = vsyncadd [#allocation3], %s22
      %s24 = sshll.u32 [#allocation2], 4
      %s25 = int_to_ptr.vmem [resolvable:$true] %s24
      %30 = dma.hbm_to_vmem [thread:$0]  %s0, 128, %s25, [#allocation3], 64, 64, 4
    $region5: #{tpu_custom_call.1} parent=1 // pred_fallthru
      _
    // Predicated region
    $region6: #{tpu_custom_call.1} parent=1 // pred_check
      _
    $region7: #{tpu_custom_call.1} parent=1 // pred_check_branch
      %32 = sbr.rel (0) target = $region9
    $region8: #{tpu_custom_call.1} parent=1 // pred_region
      %s34 = ssub.s32 6144, 6144
      %35 = vsyncadd [#allocation6], %s34
      %s36 = sshll.u32 [#allocation5], 4
      %s37 = int_to_ptr.vmem [resolvable:$true] %s36
      %42 = dma.hbm_to_vmem [thread:$0]  %s1, 6144, %s37, [#allocation6], 384, 384, 24
    $region9: #{tpu_custom_call.1} parent=1 // pred_fallthru
      _
    // Predicated region
    $region10: #{tpu_custom_call.1} parent=1 // pred_check
      _
    $region11: #{tpu_custom_call.1} parent=1 // pred_check_branch
      %44 = sbr.rel (0) target = $region13
    $region12: #{tpu_custom_call.1} parent=1 // pred_region
      %s46 = ssub.s32 18432, 18432
      %47 = vsyncadd [#allocation6], %s46
      %s48 = sshll.u32 [#allocation7], 4
      %s49 = int_to_ptr.vmem [resolvable:$true] %s48
      %54 = dma.hbm_to_vmem [thread:$0]  %s2, 18432, %s49, [#allocation6], 192, 192, 12
    $region13: #{tpu_custom_call.1} parent=1 // pred_fallthru
      _
    // Predicated region
    $region14: #{tpu_custom_call.1} parent=1 // pred_check
      _
    $region15: #{tpu_custom_call.1} parent=1 // pred_check_branch
      %56 = sbr.rel (0) target = $region17
    $region16: #{tpu_custom_call.1} parent=1 // pred_region
      _
    $region17: #{tpu_custom_call.1} parent=1 // pred_fallthru
      _
    // Predicated region
    $region18: #{tpu_custom_call.1} parent=1 // pred_check
      _
    $region19: #{tpu_custom_call.1} parent=1 // pred_check_branch
      %58 = sbr.rel (0) target = $region21
    $region20: #{tpu_custom_call.1} parent=1 // pred_region
      %s60 = ssub.s32 3072, 3072
      %61 = vsyncadd [#allocation9], %s60
      %s62 = sshll.u32 [#allocation8], 4
      %s63 = int_to_ptr.vmem [resolvable:$true] %s62
      %68 = dma.hbm_to_vmem [thread:$0]  %s4, 3072, %s63, [#allocation9], 64, 64, 4
    $region21: #{tpu_custom_call.1} parent=1 // pred_fallthru
      _
    // Predicated region
    $region22: #{tpu_custom_call.1} parent=1 // pred_check
      _
    $region23: #{tpu_custom_call.1} parent=1 // pred_check_branch
      %70 = sbr.rel (0) target = $region25
    $region24: #{tpu_custom_call.1} parent=1 // pred_region
      _
    $region25: #{tpu_custom_call.1} parent=1 // pred_fallthru
      _
    // Predicated region
    $region26: #{tpu_custom_call.1} parent=1 // pred_check
      _
    $region27: #{tpu_custom_call.1} parent=1 // pred_check_branch
      %72 = sbr.rel (0) target = $region29
    $region28: #{tpu_custom_call.1} parent=1 // pred_region
      %s74 = ssub.s32 1024, 1024
      %75 = vsyncadd [#allocation9], %s74
      %s76 = sshll.u32 [#allocation10], 4
      %s77 = int_to_ptr.vmem [resolvable:$true] %s76
      %82 = dma.hbm_to_vmem [thread:$0]  %s6, 1024, %s77, [#allocation9], 64, 64, 4
    $region29: #{tpu_custom_call.1} parent=1 // pred_fallthru
      _
    // Predicated region
    $region30: #{tpu_custom_call.1} parent=1 // pred_check
      _
    $region31: #{tpu_custom_call.1} parent=1 // pred_check_branch
      %84 = sbr.rel (0) target = $region33
    $region32: #{tpu_custom_call.1} parent=1 // pred_region
      _
    $region33: #{tpu_custom_call.1} parent=1 // pred_fallthru
      _
    // Predicated region
    $region34: #{tpu_custom_call.1} parent=1 // pred_check
      _
    $region35: #{tpu_custom_call.1} parent=1 // pred_check_branch
      %86 = sbr.rel (0) target = $region37
    $region36: #{tpu_custom_call.1} parent=1 // pred_region
      %s88 = ssub.s32 1024, 1024
      %89 = vsyncadd [#allocation12], %s88
      %s90 = sshll.u32 [#allocation11], 4
      %s91 = int_to_ptr.vmem [resolvable:$true] %s90
      %96 = dma.hbm_to_vmem [thread:$0]  %s8, 1024, %s91, [#allocation12], 64, 64, 4
    $region37: #{tpu_custom_call.1} parent=1 // pred_fallthru
      _
    // Predicated region
    $region38: #{tpu_custom_call.1} parent=1 // pred_check
      _
    $region39: #{tpu_custom_call.1} parent=1 // pred_check_branch
      %98 = sbr.rel (0) target = $region41
    $region40: #{tpu_custom_call.1} parent=1 // pred_region
      %99 = dma.done [#allocation3], 128
    $region41: #{tpu_custom_call.1} parent=1 // pred_fallthru
      _
    // Predicated region
    $region42: #{tpu_custom_call.1} parent=1 // pred_check
      _
    $region43: #{tpu_custom_call.1} parent=1 // pred_check_branch
      %101 = sbr.rel (0) target = $region45
    $region44: #{tpu_custom_call.1} parent=1 // pred_region
      %102 = dma.done [#allocation6], 6144
    $region45: #{tpu_custom_call.1} parent=1 // pred_fallthru
      _
    // Predicated region
    $region46: #{tpu_custom_call.1} parent=1 // pred_check
      _
    $region47: #{tpu_custom_call.1} parent=1 // pred_check_branch
      %104 = sbr.rel (0) target = $region49
    $region48: #{tpu_custom_call.1} parent=1 // pred_region
      %105 = dma.done [#allocation6], 18432
    $region49: #{tpu_custom_call.1} parent=1 // pred_fallthru
      _
    // Predicated region
    $region50: #{tpu_custom_call.1} parent=1 // pred_check
      _
    $region51: #{tpu_custom_call.1} parent=1 // pred_check_branch
      %107 = sbr.rel (0) target = $region53
    $region52: #{tpu_custom_call.1} parent=1 // pred_region
      %108 = dma.done [#allocation9], 3072
    $region53: #{tpu_custom_call.1} parent=1 // pred_fallthru
      _
    // Predicated region
    $region54: #{tpu_custom_call.1} parent=1 // pred_check
      _
    $region55: #{tpu_custom_call.1} parent=1 // pred_check_branch
      %110 = sbr.rel (0) target = $region57
    $region56: #{tpu_custom_call.1} parent=1 // pred_region
      %111 = dma.done [#allocation9], 1024
    $region57: #{tpu_custom_call.1} parent=1 // pred_fallthru
      _
    // Predicated region
    $region58: #{tpu_custom_call.1} parent=1 // pred_check
      _
    $region59: #{tpu_custom_call.1} parent=1 // pred_check_branch
      %113 = sbr.rel (0) target = $region61
    $region60: #{tpu_custom_call.1} parent=1 // pred_region
      %114 = dma.done [#allocation12], 1024
    $region61: #{tpu_custom_call.1} parent=1 // pred_fallthru
      _
    %v117 = vld [vmem:[#allocation2] sm:$0xf]
    %v118 = vld [vmem:[#allocation2 + $0x4] sm:$0xf]
    %v119 = vld [vmem:[#allocation5] sm:$0xff]
    %v120 = vld [vmem:[#allocation5 + $0x8] sm:$0xff]
    %v121 = vld [vmem:[#allocation5 + $0x10] sm:$0xff]
    %v122 = vld [vmem:[#allocation5 + $0x18] sm:$0xff]
    %v123 = vld [vmem:[#allocation5 + $0x20] sm:$0xff]
    %v124 = vld [vmem:[#allocation5 + $0x28] sm:$0xff]
    %v125 = vld [vmem:[#allocation5 + $0x30] sm:$0xff]
    %v126 = vld [vmem:[#allocation5 + $0x38] sm:$0xff]
    %v127 = vld [vmem:[#allocation5 + $0x40] sm:$0xff]
    %v128 = vld [vmem:[#allocation5 + $0x48] sm:$0xff]
    %v129 = vld [vmem:[#allocation5 + $0x50] sm:$0xff]
    %v130 = vld [vmem:[#allocation5 + $0x58] sm:$0xff]
    %v131 = vld [vmem:[#allocation5 + $0x60] sm:$0xff]
    %v132 = vld [vmem:[#allocation5 + $0x68] sm:$0xff]
    %v133 = vld [vmem:[#allocation5 + $0x70] sm:$0xff]
    %v134 = vld [vmem:[#allocation5 + $0x78] sm:$0xff]
    %v135 = vld [vmem:[#allocation5 + $0x80] sm:$0xff]
    %v136 = vld [vmem:[#allocation5 + $0x88] sm:$0xff]
    %v137 = vld [vmem:[#allocation5 + $0x90] sm:$0xff]
    %v138 = vld [vmem:[#allocation5 + $0x98] sm:$0xff]
    %v139 = vld [vmem:[#allocation5 + $0xa0] sm:$0xff]
    %v140 = vld [vmem:[#allocation5 + $0xa8] sm:$0xff]
    %v141 = vld [vmem:[#allocation5 + $0xb0] sm:$0xff]
    %v142 = vld [vmem:[#allocation5 + $0xb8] sm:$0xff]
    %v143 = vld [vmem:[#allocation5 + $0xc0] sm:$0xff]
    %v144 = vld [vmem:[#allocation5 + $0xc8] sm:$0xff]
    %v145 = vld [vmem:[#allocation5 + $0xd0] sm:$0xff]
    %v146 = vld [vmem:[#allocation5 + $0xd8] sm:$0xff]
    %v147 = vld [vmem:[#allocation5 + $0xe0] sm:$0xff]
    %v148 = vld [vmem:[#allocation5 + $0xe8] sm:$0xff]
    %v149 = vld [vmem:[#allocation5 + $0xf0] sm:$0xff]
    %v150 = vld [vmem:[#allocation5 + $0xf8] sm:$0xff]
    %v151 = vld [vmem:[#allocation5 + $0x100] sm:$0xff]
    %v152 = vld [vmem:[#allocation5 + $0x108] sm:$0xff]
    %v153 = vld [vmem:[#allocation5 + $0x110] sm:$0xff]
    %v154 = vld [vmem:[#allocation5 + $0x118] sm:$0xff]
    %v155 = vld [vmem:[#allocation5 + $0x120] sm:$0xff]
    %v156 = vld [vmem:[#allocation5 + $0x128] sm:$0xff]
    %v157 = vld [vmem:[#allocation5 + $0x130] sm:$0xff]
    %v158 = vld [vmem:[#allocation5 + $0x138] sm:$0xff]
    %v159 = vld [vmem:[#allocation5 + $0x140] sm:$0xff]
    %v160 = vld [vmem:[#allocation5 + $0x148] sm:$0xff]
    %v161 = vld [vmem:[#allocation5 + $0x150] sm:$0xff]
    %v162 = vld [vmem:[#allocation5 + $0x158] sm:$0xff]
    %v163 = vld [vmem:[#allocation5 + $0x160] sm:$0xff]
    %v164 = vld [vmem:[#allocation5 + $0x168] sm:$0xff]
    %v165 = vld [vmem:[#allocation5 + $0x170] sm:$0xff]
    %v166 = vld [vmem:[#allocation5 + $0x178] sm:$0xff]
    %v169 = vunpack.c.l.b16 %v117
    %v170 = vunpack.c.l.b16 %v118
    %v171 = vpack.c.b16 %v170, %v169
    %v221 = vunpack.c.l.b16 %v119
    %v222 = vunpack.c.h.b16 %v119
    %v223 = vunpack.c.l.b16 %v120
    %v224 = vunpack.c.h.b16 %v120
    %v225 = vunpack.c.l.b16 %v121
    %v226 = vunpack.c.h.b16 %v121
    %v227 = vunpack.c.l.b16 %v122
    %v228 = vunpack.c.h.b16 %v122
    %v229 = vunpack.c.l.b16 %v123
    %v230 = vunpack.c.h.b16 %v123
    %v231 = vunpack.c.l.b16 %v124
    %v232 = vunpack.c.h.b16 %v124
    %v233 = vunpack.c.l.b16 %v125
    %v234 = vunpack.c.h.b16 %v125
    %v235 = vunpack.c.l.b16 %v126
    %v236 = vunpack.c.h.b16 %v126
    %v237 = vunpack.c.l.b16 %v127
    %v238 = vunpack.c.h.b16 %v127
    %v239 = vunpack.c.l.b16 %v128
    %v240 = vunpack.c.h.b16 %v128
    %v241 = vunpack.c.l.b16 %v129
    %v242 = vunpack.c.h.b16 %v129
    %v243 = vunpack.c.l.b16 %v130
    %v244 = vunpack.c.h.b16 %v130
    %v245 = vunpack.c.l.b16 %v131
    %v246 = vunpack.c.h.b16 %v131
    %v247 = vunpack.c.l.b16 %v132
    %v248 = vunpack.c.h.b16 %v132
    %v249 = vunpack.c.l.b16 %v133
    %v250 = vunpack.c.h.b16 %v133
    %v251 = vunpack.c.l.b16 %v134
    %v252 = vunpack.c.h.b16 %v134
    %v253 = vunpack.c.l.b16 %v135
    %v254 = vunpack.c.h.b16 %v135
    %v255 = vunpack.c.l.b16 %v136
    %v256 = vunpack.c.h.b16 %v136
    %v257 = vunpack.c.l.b16 %v137
    %v258 = vunpack.c.h.b16 %v137
    %v259 = vunpack.c.l.b16 %v138
    %v260 = vunpack.c.h.b16 %v138
    %v261 = vunpack.c.l.b16 %v139
    %v262 = vunpack.c.h.b16 %v139
    %v263 = vunpack.c.l.b16 %v140
    %v264 = vunpack.c.h.b16 %v140
    %v265 = vunpack.c.l.b16 %v141
    %v266 = vunpack.c.h.b16 %v141
    %v267 = vunpack.c.l.b16 %v142
    %v268 = vunpack.c.h.b16 %v142
    %v269 = vunpack.c.l.b16 %v143
    %v270 = vunpack.c.h.b16 %v143
    %v271 = vunpack.c.l.b16 %v144
    %v272 = vunpack.c.h.b16 %v144
    %v273 = vunpack.c.l.b16 %v145
    %v274 = vunpack.c.h.b16 %v145
    %v275 = vunpack.c.l.b16 %v146
    %v276 = vunpack.c.h.b16 %v146
    %v277 = vunpack.c.l.b16 %v147
    %v278 = vunpack.c.h.b16 %v147
    %v279 = vunpack.c.l.b16 %v148
    %v280 = vunpack.c.h.b16 %v148
    %v281 = vunpack.c.l.b16 %v149
    %v282 = vunpack.c.h.b16 %v149
    %v283 = vunpack.c.l.b16 %v150
    %v284 = vunpack.c.h.b16 %v150
    %v285 = vunpack.c.l.b16 %v151
    %v286 = vunpack.c.h.b16 %v151
    %v287 = vunpack.c.l.b16 %v152
    %v288 = vunpack.c.h.b16 %v152
    %v289 = vunpack.c.l.b16 %v153
    %v290 = vunpack.c.h.b16 %v153
    %v291 = vunpack.c.l.b16 %v154
    %v292 = vunpack.c.h.b16 %v154
    %v293 = vunpack.c.l.b16 %v155
    %v294 = vunpack.c.h.b16 %v155
    %v295 = vunpack.c.l.b16 %v156
    %v296 = vunpack.c.h.b16 %v156
    %v297 = vunpack.c.l.b16 %v157
    %v298 = vunpack.c.h.b16 %v157
    %v299 = vunpack.c.l.b16 %v158
    %v300 = vunpack.c.h.b16 %v158
    %v301 = vunpack.c.l.b16 %v159
    %v302 = vunpack.c.h.b16 %v159
    %v303 = vunpack.c.l.b16 %v160
    %v304 = vunpack.c.h.b16 %v160
    %v305 = vunpack.c.l.b16 %v161
    %v306 = vunpack.c.h.b16 %v161
    %v307 = vunpack.c.l.b16 %v162
    %v308 = vunpack.c.h.b16 %v162
    %v309 = vunpack.c.l.b16 %v163
    %v310 = vunpack.c.h.b16 %v163
    %v311 = vunpack.c.l.b16 %v164
    %v312 = vunpack.c.h.b16 %v164
    %v313 = vunpack.c.l.b16 %v165
    %v314 = vunpack.c.h.b16 %v165
    %v315 = vunpack.c.l.b16 %v166
    %v316 = vunpack.c.h.b16 %v166
    %v317 = vpack.c.b16 %v227, %v221
    %v318 = vpack.c.b16 %v228, %v222
    %v319 = vpack.c.b16 %v229, %v223
    %v320 = vpack.c.b16 %v230, %v224
    %v321 = vpack.c.b16 %v231, %v225
    %v322 = vpack.c.b16 %v232, %v226
    %v323 = vpack.c.b16 %v239, %v233
    %v324 = vpack.c.b16 %v240, %v234
    %v325 = vpack.c.b16 %v241, %v235
    %v326 = vpack.c.b16 %v242, %v236
    %v327 = vpack.c.b16 %v243, %v237
    %v328 = vpack.c.b16 %v244, %v238
    %v329 = vpack.c.b16 %v251, %v245
    %v330 = vpack.c.b16 %v252, %v246
    %v331 = vpack.c.b16 %v253, %v247
    %v332 = vpack.c.b16 %v254, %v248
    %v333 = vpack.c.b16 %v255, %v249
    %v334 = vpack.c.b16 %v256, %v250
    %v335 = vpack.c.b16 %v263, %v257
    %v336 = vpack.c.b16 %v264, %v258
    %v337 = vpack.c.b16 %v265, %v259
    %v338 = vpack.c.b16 %v266, %v260
    %v339 = vpack.c.b16 %v267, %v261
    %v340 = vpack.c.b16 %v268, %v262
    %v341 = vpack.c.b16 %v275, %v269
    %v342 = vpack.c.b16 %v276, %v270
    %v343 = vpack.c.b16 %v277, %v271
    %v344 = vpack.c.b16 %v278, %v272
    %v345 = vpack.c.b16 %v279, %v273
    %v346 = vpack.c.b16 %v280, %v274
    %v347 = vpack.c.b16 %v287, %v281
    %v348 = vpack.c.b16 %v288, %v282
    %v349 = vpack.c.b16 %v289, %v283
    %v350 = vpack.c.b16 %v290, %v284
    %v351 = vpack.c.b16 %v291, %v285
    %v352 = vpack.c.b16 %v292, %v286
    %v353 = vpack.c.b16 %v299, %v293
    %v354 = vpack.c.b16 %v300, %v294
    %v355 = vpack.c.b16 %v301, %v295
    %v356 = vpack.c.b16 %v302, %v296
    %v357 = vpack.c.b16 %v303, %v297
    %v358 = vpack.c.b16 %v304, %v298
    %v359 = vpack.c.b16 %v311, %v305
    %v360 = vpack.c.b16 %v312, %v306
    %v361 = vpack.c.b16 %v313, %v307
    %v362 = vpack.c.b16 %v314, %v308
    %v363 = vpack.c.b16 %v315, %v309
    %v364 = vpack.c.b16 %v316, %v310
    %413 = vmatprep.subr.bf16.mxu0 %v318
    %414 = vmatpush1.bf16.msra.mxu0 %v317
    %415 = vmatprep.subr.bf16.mxu0 %v324
    %416 = vmatpush1.bf16.msra.mxu0 %v323
    %417 = vmatprep.subr.bf16.mxu0 %v330
    %418 = vmatpush1.bf16.msra.mxu0 %v329
    %419 = vmatprep.subr.bf16.mxu0 %v336
    %420 = vmatpush1.bf16.msra.mxu0 %v335
    %421 = vmatprep.subr.bf16.mxu0 %v342
    %422 = vmatpush1.bf16.msra.mxu0 %v341
    %423 = vmatprep.subr.bf16.mxu0 %v348
    %424 = vmatpush1.bf16.msra.mxu0 %v347
    %425 = vmatprep.subr.bf16.mxu0 %v354
    %426 = vmatpush1.bf16.msra.mxu0 %v353
    %427 = vmatprep.subr.bf16.mxu0 %v360
    %428 = vmatpush1.bf16.msra.mxu0 %v359
    %429 = vmatprep.subr.bf16.mxu0 0
    %430 = vmatpush1.bf16.msra.mxu0 0
    %431 = vmatprep.subr.bf16.mxu0 0
    %432 = vmatpush1.bf16.msra.mxu0 0
    %433 = vmatprep.subr.bf16.mxu0 0
    %434 = vmatpush1.bf16.msra.mxu0 0
    %435 = vmatprep.subr.bf16.mxu0 0
    %436 = vmatpush1.bf16.msra.mxu0 0
    %437 = vmatprep.subr.bf16.mxu0 0
    %438 = vmatpush1.bf16.msra.mxu0 0
    %439 = vmatprep.subr.bf16.mxu0 0
    %440 = vmatpush1.bf16.msra.mxu0 0
    %441 = vmatprep.subr.bf16.mxu0 0
    %442 = vmatpush1.bf16.msra.mxu0 0
    %443 = vmatprep.subr.bf16.mxu0 0
    %444 = vmatpush1.bf16.msra.mxu0 0
    %445 = vmatprep.mubr.bf16.mxu0 0
    %446 = vmatmul.mubr.bf16.gmra.mrb[0].mxu0 %v171
    %v447 = vpop.f32.mrb[0].mxu0
    %v448 = vadd.f32 0.0, %v447
    %v449 = vpop.f32.mrb[0].mxu0
    %v450 = vadd.f32 0.0, %v449
    %v451 = vpop.f32.mrb[0].mxu0
    %v452 = vadd.f32 0.0, %v451
    %v453 = vpop.f32.mrb[0].mxu0
    %v454 = vadd.f32 0.0, %v453
    %455 = vdwg.mxu0
    %456 = vmatprep.subr.bf16.mxu0 %v320
    %457 = vmatpush1.bf16.msra.mxu0 %v319
    %458 = vmatprep.subr.bf16.mxu0 %v326
    %459 = vmatpush1.bf16.msra.mxu0 %v325
    %460 = vmatprep.subr.bf16.mxu0 %v332
    %461 = vmatpush1.bf16.msra.mxu0 %v331
    %462 = vmatprep.subr.bf16.mxu0 %v338
    %463 = vmatpush1.bf16.msra.mxu0 %v337
    %464 = vmatprep.subr.bf16.mxu0 %v344
    %465 = vmatpush1.bf16.msra.mxu0 %v343
    %466 = vmatprep.subr.bf16.mxu0 %v350
    %467 = vmatpush1.bf16.msra.mxu0 %v349
    %468 = vmatprep.subr.bf16.mxu0 %v356
    %469 = vmatpush1.bf16.msra.mxu0 %v355
    %470 = vmatprep.subr.bf16.mxu0 %v362
    %471 = vmatpush1.bf16.msra.mxu0 %v361
    %472 = vmatprep.subr.bf16.mxu0 0
    %473 = vmatpush1.bf16.msra.mxu0 0
    %474 = vmatprep.subr.bf16.mxu0 0
    %475 = vmatpush1.bf16.msra.mxu0 0
    %476 = vmatprep.subr.bf16.mxu0 0
    %477 = vmatpush1.bf16.msra.mxu0 0
    %478 = vmatprep.subr.bf16.mxu0 0
    %479 = vmatpush1.bf16.msra.mxu0 0
    %480 = vmatprep.subr.bf16.mxu0 0
    %481 = vmatpush1.bf16.msra.mxu0 0
    %482 = vmatprep.subr.bf16.mxu0 0
    %483 = vmatpush1.bf16.msra.mxu0 0
    %484 = vmatprep.subr.bf16.mxu0 0
    %485 = vmatpush1.bf16.msra.mxu0 0
    %486 = vmatprep.subr.bf16.mxu0 0
    %487 = vmatpush1.bf16.msra.mxu0 0
    %488 = vmatprep.mubr.bf16.mxu0 0
    %489 = vmatmul.mubr.bf16.gmra.mrb[0].mxu0 %v171
    %v490 = vpop.f32.mrb[0].mxu0
    %v491 = vadd.f32 0.0, %v490
    %v492 = vpop.f32.mrb[0].mxu0
    %v493 = vadd.f32 0.0, %v492
    %v494 = vpop.f32.mrb[0].mxu0
    %v495 = vadd.f32 0.0, %v494
    %v496 = vpop.f32.mrb[0].mxu0
    %v497 = vadd.f32 0.0, %v496
    %498 = vdwg.mxu0
    %499 = vmatprep.subr.bf16.mxu0 %v322
    %500 = vmatpush1.bf16.msra.mxu0 %v321
    %501 = vmatprep.subr.bf16.mxu0 %v328
    %502 = vmatpush1.bf16.msra.mxu0 %v327
    %503 = vmatprep.subr.bf16.mxu0 %v334
    %504 = vmatpush1.bf16.msra.mxu0 %v333
    %505 = vmatprep.subr.bf16.mxu0 %v340
    %506 = vmatpush1.bf16.msra.mxu0 %v339
    %507 = vmatprep.subr.bf16.mxu0 %v346
    %508 = vmatpush1.bf16.msra.mxu0 %v345
    %509 = vmatprep.subr.bf16.mxu0 %v352
    %510 = vmatpush1.bf16.msra.mxu0 %v351
    %511 = vmatprep.subr.bf16.mxu0 %v358
    %512 = vmatpush1.bf16.msra.mxu0 %v357
    %513 = vmatprep.subr.bf16.mxu0 %v364
    %514 = vmatpush1.bf16.msra.mxu0 %v363
    %515 = vmatprep.subr.bf16.mxu0 0
    %516 = vmatpush1.bf16.msra.mxu0 0
    %517 = vmatprep.subr.bf16.mxu0 0
    %518 = vmatpush1.bf16.msra.mxu0 0
    %519 = vmatprep.subr.bf16.mxu0 0
    %520 = vmatpush1.bf16.msra.mxu0 0
    %521 = vmatprep.subr.bf16.mxu0 0
    %522 = vmatpush1.bf16.msra.mxu0 0
    %523 = vmatprep.subr.bf16.mxu0 0
    %524 = vmatpush1.bf16.msra.mxu0 0
    %525 = vmatprep.subr.bf16.mxu0 0
    %526 = vmatpush1.bf16.msra.mxu0 0
    %527 = vmatprep.subr.bf16.mxu0 0
    %528 = vmatpush1.bf16.msra.mxu0 0
    %529 = vmatprep.subr.bf16.mxu0 0
    %530 = vmatpush1.bf16.msra.mxu0 0
    %531 = vmatprep.mubr.bf16.mxu0 0
    %532 = vmatmul.mubr.bf16.gmra.mrb[0].mxu0 %v171
    %v533 = vpop.f32.mrb[0].mxu0
    %v534 = vadd.f32 0.0, %v533
    %v535 = vpop.f32.mrb[0].mxu0
    %v536 = vadd.f32 0.0, %v535
    %v537 = vpop.f32.mrb[0].mxu0
    %v538 = vadd.f32 0.0, %v537
    %v539 = vpop.f32.mrb[0].mxu0
    %v540 = vadd.f32 0.0, %v539
    %541 = vdwg.mxu0
    %v542 = vpack.c.bf16 %v452, %v448
    %v543 = vpack.c.bf16 %v454, %v450
    %v544 = vpack.c.bf16 %v495, %v491
    %v545 = vpack.c.bf16 %v497, %v493
    %v546 = vpack.c.bf16 %v538, %v534
    %v547 = vpack.c.bf16 %v540, %v536
    %v548 = vmul.bf16 %v542, 1036860877
    %v549 = vmul.bf16 %v543, 1036860877
    %v550 = vmul.bf16 %v544, 1036860877
    %v551 = vmul.bf16 %v545, 1036860877
    %v552 = vmul.bf16 %v546, 1036860877
    %v553 = vmul.bf16 %v547, 1036860877
    %v554 = vmax.bf16 %v542, %v548
    %v555 = vmax.bf16 %v543, %v549
    %v556 = vmax.bf16 %v544, %v550
    %v557 = vmax.bf16 %v545, %v551
    %v558 = vmax.bf16 %v546, %v552
    %v559 = vmax.bf16 %v547, %v553
    %v560 = vld [vmem:[#allocation7] sm:$0xff]
    %v561 = vld [vmem:[#allocation7 + $0x8] sm:$0xf]
    %v562 = vld [vmem:[#allocation7 + $0xc] sm:$0xff]
    %v563 = vld [vmem:[#allocation7 + $0x14] sm:$0xf]
    %v564 = vld [vmem:[#allocation7 + $0x18] sm:$0xff]
    %v565 = vld [vmem:[#allocation7 + $0x20] sm:$0xf]
    %v566 = vld [vmem:[#allocation7 + $0x24] sm:$0xff]
    %v567 = vld [vmem:[#allocation7 + $0x2c] sm:$0xf]
    %v568 = vld [vmem:[#allocation7 + $0x30] sm:$0xff]
    %v569 = vld [vmem:[#allocation7 + $0x38] sm:$0xf]
    %v570 = vld [vmem:[#allocation7 + $0x3c] sm:$0xff]
    %v571 = vld [vmem:[#allocation7 + $0x44] sm:$0xf]
    %v572 = vld [vmem:[#allocation7 + $0x48] sm:$0xff]
    %v573 = vld [vmem:[#allocation7 + $0x50] sm:$0xf]
    %v574 = vld [vmem:[#allocation7 + $0x54] sm:$0xff]
    %v575 = vld [vmem:[#allocation7 + $0x5c] sm:$0xf]
    %v576 = vld [vmem:[#allocation7 + $0x60] sm:$0xff]
    %v577 = vld [vmem:[#allocation7 + $0x68] sm:$0xf]
    %v578 = vld [vmem:[#allocation7 + $0x6c] sm:$0xff]
    %v579 = vld [vmem:[#allocation7 + $0x74] sm:$0xf]
    %v580 = vld [vmem:[#allocation7 + $0x78] sm:$0xff]
    %v581 = vld [vmem:[#allocation7 + $0x80] sm:$0xf]
    %v582 = vld [vmem:[#allocation7 + $0x84] sm:$0xff]
    %v583 = vld [vmem:[#allocation7 + $0x8c] sm:$0xf]
    %v584 = vld [vmem:[#allocation7 + $0x90] sm:$0xff]
    %v585 = vld [vmem:[#allocation7 + $0x98] sm:$0xf]
    %v586 = vld [vmem:[#allocation7 + $0x9c] sm:$0xff]
    %v587 = vld [vmem:[#allocation7 + $0xa4] sm:$0xf]
    %v588 = vld [vmem:[#allocation7 + $0xa8] sm:$0xff]
    %v589 = vld [vmem:[#allocation7 + $0xb0] sm:$0xf]
    %v590 = vld [vmem:[#allocation7 + $0xb4] sm:$0xff]
    %v591 = vld [vmem:[#allocation7 + $0xbc] sm:$0xf]
    %v592 = vld [vmem:[#allocation7 + $0xc0] sm:$0xff]
    %v593 = vld [vmem:[#allocation7 + $0xc8] sm:$0xf]
    %v594 = vld [vmem:[#allocation7 + $0xcc] sm:$0xff]
    %v595 = vld [vmem:[#allocation7 + $0xd4] sm:$0xf]
    %v596 = vld [vmem:[#allocation7 + $0xd8] sm:$0xff]
    %v597 = vld [vmem:[#allocation7 + $0xe0] sm:$0xf]
    %v598 = vld [vmem:[#allocation7 + $0xe4] sm:$0xff]
    %v599 = vld [vmem:[#allocation7 + $0xec] sm:$0xf]
    %v600 = vld [vmem:[#allocation7 + $0xf0] sm:$0xff]
    %v601 = vld [vmem:[#allocation7 + $0xf8] sm:$0xf]
    %v602 = vld [vmem:[#allocation7 + $0xfc] sm:$0xff]
    %v603 = vld [vmem:[#allocation7 + $0x104] sm:$0xf]
    %v604 = vld [vmem:[#allocation7 + $0x108] sm:$0xff]
    %v605 = vld [vmem:[#allocation7 + $0x110] sm:$0xf]
    %v606 = vld [vmem:[#allocation7 + $0x114] sm:$0xff]
    %v607 = vld [vmem:[#allocation7 + $0x11c] sm:$0xf]
    %v608 = vld [vmem:[#allocation7 + $0x120] sm:$0xff]
    %v609 = vld [vmem:[#allocation7 + $0x128] sm:$0xf]
    %v610 = vld [vmem:[#allocation7 + $0x12c] sm:$0xff]
    %v611 = vld [vmem:[#allocation7 + $0x134] sm:$0xf]
    %v612 = vld [vmem:[#allocation7 + $0x138] sm:$0xff]
    %v613 = vld [vmem:[#allocation7 + $0x140] sm:$0xf]
    %v614 = vld [vmem:[#allocation7 + $0x144] sm:$0xff]
    %v615 = vld [vmem:[#allocation7 + $0x14c] sm:$0xf]
    %v616 = vld [vmem:[#allocation7 + $0x150] sm:$0xff]
    %v617 = vld [vmem:[#allocation7 + $0x158] sm:$0xf]
    %v618 = vld [vmem:[#allocation7 + $0x15c] sm:$0xff]
    %v619 = vld [vmem:[#allocation7 + $0x164] sm:$0xf]
    %v620 = vld [vmem:[#allocation7 + $0x168] sm:$0xff]
    %v621 = vld [vmem:[#allocation7 + $0x170] sm:$0xf]
    %v622 = vld [vmem:[#allocation7 + $0x174] sm:$0xff]
    %v623 = vld [vmem:[#allocation7 + $0x17c] sm:$0xf]
    %v624 = vld [vmem:[#allocation7 + $0x180] sm:$0xff]
    %v625 = vld [vmem:[#allocation7 + $0x188] sm:$0xf]
    %v626 = vld [vmem:[#allocation7 + $0x18c] sm:$0xff]
    %v627 = vld [vmem:[#allocation7 + $0x194] sm:$0xf]
    %v628 = vld [vmem:[#allocation7 + $0x198] sm:$0xff]
    %v629 = vld [vmem:[#allocation7 + $0x1a0] sm:$0xf]
    %v630 = vld [vmem:[#allocation7 + $0x1a4] sm:$0xff]
    %v631 = vld [vmem:[#allocation7 + $0x1ac] sm:$0xf]
    %v632 = vld [vmem:[#allocation7 + $0x1b0] sm:$0xff]
    %v633 = vld [vmem:[#allocation7 + $0x1b8] sm:$0xf]
    %v634 = vld [vmem:[#allocation7 + $0x1bc] sm:$0xff]
    %v635 = vld [vmem:[#allocation7 + $0x1c4] sm:$0xf]
    %v636 = vld [vmem:[#allocation7 + $0x1c8] sm:$0xff]
    %v637 = vld [vmem:[#allocation7 + $0x1d0] sm:$0xf]
    %v638 = vld [vmem:[#allocation7 + $0x1d4] sm:$0xff]
    %v639 = vld [vmem:[#allocation7 + $0x1dc] sm:$0xf]
    %v640 = vld [vmem:[#allocation7 + $0x1e0] sm:$0xff]
    %v641 = vld [vmem:[#allocation7 + $0x1e8] sm:$0xf]
    %v642 = vld [vmem:[#allocation7 + $0x1ec] sm:$0xff]
    %v643 = vld [vmem:[#allocation7 + $0x1f4] sm:$0xf]
    %v644 = vld [vmem:[#allocation7 + $0x1f8] sm:$0xff]
    %v645 = vld [vmem:[#allocation7 + $0x200] sm:$0xf]
    %v646 = vld [vmem:[#allocation7 + $0x204] sm:$0xff]
    %v647 = vld [vmem:[#allocation7 + $0x20c] sm:$0xf]
    %v648 = vld [vmem:[#allocation7 + $0x210] sm:$0xff]
    %v649 = vld [vmem:[#allocation7 + $0x218] sm:$0xf]
    %v650 = vld [vmem:[#allocation7 + $0x21c] sm:$0xff]
    %v651 = vld [vmem:[#allocation7 + $0x224] sm:$0xf]
    %v652 = vld [vmem:[#allocation7 + $0x228] sm:$0xff]
    %v653 = vld [vmem:[#allocation7 + $0x230] sm:$0xf]
    %v654 = vld [vmem:[#allocation7 + $0x234] sm:$0xff]
    %v655 = vld [vmem:[#allocation7 + $0x23c] sm:$0xf]
    %v656 = vld [vmem:[#allocation7 + $0x240] sm:$0xff]
    %v657 = vld [vmem:[#allocation7 + $0x248] sm:$0xf]
    %v658 = vld [vmem:[#allocation7 + $0x24c] sm:$0xff]
    %v659 = vld [vmem:[#allocation7 + $0x254] sm:$0xf]
    %v660 = vld [vmem:[#allocation7 + $0x258] sm:$0xff]
    %v661 = vld [vmem:[#allocation7 + $0x260] sm:$0xf]
    %v662 = vld [vmem:[#allocation7 + $0x264] sm:$0xff]
    %v663 = vld [vmem:[#allocation7 + $0x26c] sm:$0xf]
    %v664 = vld [vmem:[#allocation7 + $0x270] sm:$0xff]
    %v665 = vld [vmem:[#allocation7 + $0x278] sm:$0xf]
    %v666 = vld [vmem:[#allocation7 + $0x27c] sm:$0xff]
    %v667 = vld [vmem:[#allocation7 + $0x284] sm:$0xf]
    %v668 = vld [vmem:[#allocation7 + $0x288] sm:$0xff]
    %v669 = vld [vmem:[#allocation7 + $0x290] sm:$0xf]
    %v670 = vld [vmem:[#allocation7 + $0x294] sm:$0xff]
    %v671 = vld [vmem:[#allocation7 + $0x29c] sm:$0xf]
    %v672 = vld [vmem:[#allocation7 + $0x2a0] sm:$0xff]
    %v673 = vld [vmem:[#allocation7 + $0x2a8] sm:$0xf]
    %v674 = vld [vmem:[#allocation7 + $0x2ac] sm:$0xff]
    %v675 = vld [vmem:[#allocation7 + $0x2b4] sm:$0xf]
    %v676 = vld [vmem:[#allocation7 + $0x2b8] sm:$0xff]
    %v677 = vld [vmem:[#allocation7 + $0x2c0] sm:$0xf]
    %v678 = vld [vmem:[#allocation7 + $0x2c4] sm:$0xff]
    %v679 = vld [vmem:[#allocation7 + $0x2cc] sm:$0xf]
    %v680 = vld [vmem:[#allocation7 + $0x2d0] sm:$0xff]
    %v681 = vld [vmem:[#allocation7 + $0x2d8] sm:$0xf]
    %v682 = vld [vmem:[#allocation7 + $0x2dc] sm:$0xff]
    %v683 = vld [vmem:[#allocation7 + $0x2e4] sm:$0xf]
    %v684 = vld [vmem:[#allocation7 + $0x2e8] sm:$0xff]
    %v685 = vld [vmem:[#allocation7 + $0x2f0] sm:$0xf]
    %v686 = vld [vmem:[#allocation7 + $0x2f4] sm:$0xff]
    %v687 = vld [vmem:[#allocation7 + $0x2fc] sm:$0xf]
    %v688 = vld [vmem:[#allocation7 + $0x300] sm:$0xff]
    %v689 = vld [vmem:[#allocation7 + $0x308] sm:$0xf]
    %v690 = vld [vmem:[#allocation7 + $0x30c] sm:$0xff]
    %v691 = vld [vmem:[#allocation7 + $0x314] sm:$0xf]
    %v692 = vld [vmem:[#allocation7 + $0x318] sm:$0xff]
    %v693 = vld [vmem:[#allocation7 + $0x320] sm:$0xf]
    %v694 = vld [vmem:[#allocation7 + $0x324] sm:$0xff]
    %v695 = vld [vmem:[#allocation7 + $0x32c] sm:$0xf]
    %v696 = vld [vmem:[#allocation7 + $0x330] sm:$0xff]
    %v697 = vld [vmem:[#allocation7 + $0x338] sm:$0xf]
    %v698 = vld [vmem:[#allocation7 + $0x33c] sm:$0xff]
    %v699 = vld [vmem:[#allocation7 + $0x344] sm:$0xf]
    %v700 = vld [vmem:[#allocation7 + $0x348] sm:$0xff]
    %v701 = vld [vmem:[#allocation7 + $0x350] sm:$0xf]
    %v702 = vld [vmem:[#allocation7 + $0x354] sm:$0xff]
    %v703 = vld [vmem:[#allocation7 + $0x35c] sm:$0xf]
    %v704 = vld [vmem:[#allocation7 + $0x360] sm:$0xff]
    %v705 = vld [vmem:[#allocation7 + $0x368] sm:$0xf]
    %v706 = vld [vmem:[#allocation7 + $0x36c] sm:$0xff]
    %v707 = vld [vmem:[#allocation7 + $0x374] sm:$0xf]
    %v708 = vld [vmem:[#allocation7 + $0x378] sm:$0xff]
    %v709 = vld [vmem:[#allocation7 + $0x380] sm:$0xf]
    %v710 = vld [vmem:[#allocation7 + $0x384] sm:$0xff]
    %v711 = vld [vmem:[#allocation7 + $0x38c] sm:$0xf]
    %v712 = vld [vmem:[#allocation7 + $0x390] sm:$0xff]
    %v713 = vld [vmem:[#allocation7 + $0x398] sm:$0xf]
    %v714 = vld [vmem:[#allocation7 + $0x39c] sm:$0xff]
    %v715 = vld [vmem:[#allocation7 + $0x3a4] sm:$0xf]
    %v716 = vld [vmem:[#allocation7 + $0x3a8] sm:$0xff]
    %v717 = vld [vmem:[#allocation7 + $0x3b0] sm:$0xf]
    %v718 = vld [vmem:[#allocation7 + $0x3b4] sm:$0xff]
    %v719 = vld [vmem:[#allocation7 + $0x3bc] sm:$0xf]
    %v720 = vld [vmem:[#allocation7 + $0x3c0] sm:$0xff]
    %v721 = vld [vmem:[#allocation7 + $0x3c8] sm:$0xf]
    %v722 = vld [vmem:[#allocation7 + $0x3cc] sm:$0xff]
    %v723 = vld [vmem:[#allocation7 + $0x3d4] sm:$0xf]
    %v724 = vld [vmem:[#allocation7 + $0x3d8] sm:$0xff]
    %v725 = vld [vmem:[#allocation7 + $0x3e0] sm:$0xf]
    %v726 = vld [vmem:[#allocation7 + $0x3e4] sm:$0xff]
    %v727 = vld [vmem:[#allocation7 + $0x3ec] sm:$0xf]
    %v728 = vld [vmem:[#allocation7 + $0x3f0] sm:$0xff]
    %v729 = vld [vmem:[#allocation7 + $0x3f8] sm:$0xf]
    %v730 = vld [vmem:[#allocation7 + $0x3fc] sm:$0xff]
    %v731 = vld [vmem:[#allocation7 + $0x404] sm:$0xf]
    %v732 = vld [vmem:[#allocation7 + $0x408] sm:$0xff]
    %v733 = vld [vmem:[#allocation7 + $0x410] sm:$0xf]
    %v734 = vld [vmem:[#allocation7 + $0x414] sm:$0xff]
    %v735 = vld [vmem:[#allocation7 + $0x41c] sm:$0xf]
    %v736 = vld [vmem:[#allocation7 + $0x420] sm:$0xff]
    %v737 = vld [vmem:[#allocation7 + $0x428] sm:$0xf]
    %v738 = vld [vmem:[#allocation7 + $0x42c] sm:$0xff]
    %v739 = vld [vmem:[#allocation7 + $0x434] sm:$0xf]
    %v740 = vld [vmem:[#allocation7 + $0x438] sm:$0xff]
    %v741 = vld [vmem:[#allocation7 + $0x440] sm:$0xf]
    %v742 = vld [vmem:[#allocation7 + $0x444] sm:$0xff]
    %v743 = vld [vmem:[#allocation7 + $0x44c] sm:$0xf]
    %v744 = vld [vmem:[#allocation7 + $0x450] sm:$0xff]
    %v745 = vld [vmem:[#allocation7 + $0x458] sm:$0xf]
    %v746 = vld [vmem:[#allocation7 + $0x45c] sm:$0xff]
    %v747 = vld [vmem:[#allocation7 + $0x464] sm:$0xf]
    %v748 = vld [vmem:[#allocation7 + $0x468] sm:$0xff]
    %v749 = vld [vmem:[#allocation7 + $0x470] sm:$0xf]
    %v750 = vld [vmem:[#allocation7 + $0x474] sm:$0xff]
    %v751 = vld [vmem:[#allocation7 + $0x47c] sm:$0xf]
    %v944 = vunpack.c.l.b16 %v560
    %v945 = vunpack.c.h.b16 %v560
    %v946 = vunpack.c.l.b16 %v561
    %v947 = vunpack.c.l.b16 %v562
    %v948 = vunpack.c.h.b16 %v562
    %v949 = vunpack.c.l.b16 %v563
    %v950 = vunpack.c.l.b16 %v564
    %v951 = vunpack.c.h.b16 %v564
    %v952 = vunpack.c.l.b16 %v565
    %v953 = vunpack.c.l.b16 %v566
    %v954 = vunpack.c.h.b16 %v566
    %v955 = vunpack.c.l.b16 %v567
    %v956 = vunpack.c.l.b16 %v568
    %v957 = vunpack.c.h.b16 %v568
    %v958 = vunpack.c.l.b16 %v569
    %v959 = vunpack.c.l.b16 %v570
    %v960 = vunpack.c.h.b16 %v570
    %v961 = vunpack.c.l.b16 %v571
    %v962 = vunpack.c.l.b16 %v572
    %v963 = vunpack.c.h.b16 %v572
    %v964 = vunpack.c.l.b16 %v573
    %v965 = vunpack.c.l.b16 %v574
    %v966 = vunpack.c.h.b16 %v574
    %v967 = vunpack.c.l.b16 %v575
    %v968 = vunpack.c.l.b16 %v576
    %v969 = vunpack.c.h.b16 %v576
    %v970 = vunpack.c.l.b16 %v577
    %v971 = vunpack.c.l.b16 %v578
    %v972 = vunpack.c.h.b16 %v578
    %v973 = vunpack.c.l.b16 %v579
    %v974 = vunpack.c.l.b16 %v580
    %v975 = vunpack.c.h.b16 %v580
    %v976 = vunpack.c.l.b16 %v581
    %v977 = vunpack.c.l.b16 %v582
    %v978 = vunpack.c.h.b16 %v582
    %v979 = vunpack.c.l.b16 %v583
    %v980 = vunpack.c.l.b16 %v584
    %v981 = vunpack.c.h.b16 %v584
    %v982 = vunpack.c.l.b16 %v585
    %v983 = vunpack.c.l.b16 %v586
    %v984 = vunpack.c.h.b16 %v586
    %v985 = vunpack.c.l.b16 %v587
    %v986 = vunpack.c.l.b16 %v588
    %v987 = vunpack.c.h.b16 %v588
    %v988 = vunpack.c.l.b16 %v589
    %v989 = vunpack.c.l.b16 %v590
    %v990 = vunpack.c.h.b16 %v590
    %v991 = vunpack.c.l.b16 %v591
    %v992 = vunpack.c.l.b16 %v592
    %v993 = vunpack.c.h.b16 %v592
    %v994 = vunpack.c.l.b16 %v593
    %v995 = vunpack.c.l.b16 %v594
    %v996 = vunpack.c.h.b16 %v594
    %v997 = vunpack.c.l.b16 %v595
    %v998 = vunpack.c.l.b16 %v596
    %v999 = vunpack.c.h.b16 %v596
    %v1000 = vunpack.c.l.b16 %v597
    %v1001 = vunpack.c.l.b16 %v598
    %v1002 = vunpack.c.h.b16 %v598
    %v1003 = vunpack.c.l.b16 %v599
    %v1004 = vunpack.c.l.b16 %v600
    %v1005 = vunpack.c.h.b16 %v600
    %v1006 = vunpack.c.l.b16 %v601
    %v1007 = vunpack.c.l.b16 %v602
    %v1008 = vunpack.c.h.b16 %v602
    %v1009 = vunpack.c.l.b16 %v603
    %v1010 = vunpack.c.l.b16 %v604
    %v1011 = vunpack.c.h.b16 %v604
    %v1012 = vunpack.c.l.b16 %v605
    %v1013 = vunpack.c.l.b16 %v606
    %v1014 = vunpack.c.h.b16 %v606
    %v1015 = vunpack.c.l.b16 %v607
    %v1016 = vunpack.c.l.b16 %v608
    %v1017 = vunpack.c.h.b16 %v608
    %v1018 = vunpack.c.l.b16 %v609
    %v1019 = vunpack.c.l.b16 %v610
    %v1020 = vunpack.c.h.b16 %v610
    %v1021 = vunpack.c.l.b16 %v611
    %v1022 = vunpack.c.l.b16 %v612
    %v1023 = vunpack.c.h.b16 %v612
    %v1024 = vunpack.c.l.b16 %v613
    %v1025 = vunpack.c.l.b16 %v614
    %v1026 = vunpack.c.h.b16 %v614
    %v1027 = vunpack.c.l.b16 %v615
    %v1028 = vunpack.c.l.b16 %v616
    %v1029 = vunpack.c.h.b16 %v616
    %v1030 = vunpack.c.l.b16 %v617
    %v1031 = vunpack.c.l.b16 %v618
    %v1032 = vunpack.c.h.b16 %v618
    %v1033 = vunpack.c.l.b16 %v619
    %v1034 = vunpack.c.l.b16 %v620
    %v1035 = vunpack.c.h.b16 %v620
    %v1036 = vunpack.c.l.b16 %v621
    %v1037 = vunpack.c.l.b16 %v622
    %v1038 = vunpack.c.h.b16 %v622
    %v1039 = vunpack.c.l.b16 %v623
    %v1040 = vunpack.c.l.b16 %v624
    %v1041 = vunpack.c.h.b16 %v624
    %v1042 = vunpack.c.l.b16 %v625
    %v1043 = vunpack.c.l.b16 %v626
    %v1044 = vunpack.c.h.b16 %v626
    %v1045 = vunpack.c.l.b16 %v627
    %v1046 = vunpack.c.l.b16 %v628
    %v1047 = vunpack.c.h.b16 %v628
    %v1048 = vunpack.c.l.b16 %v629
    %v1049 = vunpack.c.l.b16 %v630
    %v1050 = vunpack.c.h.b16 %v630
    %v1051 = vunpack.c.l.b16 %v631
    %v1052 = vunpack.c.l.b16 %v632
    %v1053 = vunpack.c.h.b16 %v632
    %v1054 = vunpack.c.l.b16 %v633
    %v1055 = vunpack.c.l.b16 %v634
    %v1056 = vunpack.c.h.b16 %v634
    %v1057 = vunpack.c.l.b16 %v635
    %v1058 = vunpack.c.l.b16 %v636
    %v1059 = vunpack.c.h.b16 %v636
    %v1060 = vunpack.c.l.b16 %v637
    %v1061 = vunpack.c.l.b16 %v638
    %v1062 = vunpack.c.h.b16 %v638
    %v1063 = vunpack.c.l.b16 %v639
    %v1064 = vunpack.c.l.b16 %v640
    %v1065 = vunpack.c.h.b16 %v640
    %v1066 = vunpack.c.l.b16 %v641
    %v1067 = vunpack.c.l.b16 %v642
    %v1068 = vunpack.c.h.b16 %v642
    %v1069 = vunpack.c.l.b16 %v643
    %v1070 = vunpack.c.l.b16 %v644
    %v1071 = vunpack.c.h.b16 %v644
    %v1072 = vunpack.c.l.b16 %v645
    %v1073 = vunpack.c.l.b16 %v646
    %v1074 = vunpack.c.h.b16 %v646
    %v1075 = vunpack.c.l.b16 %v647
    %v1076 = vunpack.c.l.b16 %v648
    %v1077 = vunpack.c.h.b16 %v648
    %v1078 = vunpack.c.l.b16 %v649
    %v1079 = vunpack.c.l.b16 %v650
    %v1080 = vunpack.c.h.b16 %v650
    %v1081 = vunpack.c.l.b16 %v651
    %v1082 = vunpack.c.l.b16 %v652
    %v1083 = vunpack.c.h.b16 %v652
    %v1084 = vunpack.c.l.b16 %v653
    %v1085 = vunpack.c.l.b16 %v654
    %v1086 = vunpack.c.h.b16 %v654
    %v1087 = vunpack.c.l.b16 %v655
    %v1088 = vunpack.c.l.b16 %v656
    %v1089 = vunpack.c.h.b16 %v656
    %v1090 = vunpack.c.l.b16 %v657
    %v1091 = vunpack.c.l.b16 %v658
    %v1092 = vunpack.c.h.b16 %v658
    %v1093 = vunpack.c.l.b16 %v659
    %v1094 = vunpack.c.l.b16 %v660
    %v1095 = vunpack.c.h.b16 %v660
    %v1096 = vunpack.c.l.b16 %v661
    %v1097 = vunpack.c.l.b16 %v662
    %v1098 = vunpack.c.h.b16 %v662
    %v1099 = vunpack.c.l.b16 %v663
    %v1100 = vunpack.c.l.b16 %v664
    %v1101 = vunpack.c.h.b16 %v664
    %v1102 = vunpack.c.l.b16 %v665
    %v1103 = vunpack.c.l.b16 %v666
    %v1104 = vunpack.c.h.b16 %v666
    %v1105 = vunpack.c.l.b16 %v667
    %v1106 = vunpack.c.l.b16 %v668
    %v1107 = vunpack.c.h.b16 %v668
    %v1108 = vunpack.c.l.b16 %v669
    %v1109 = vunpack.c.l.b16 %v670
    %v1110 = vunpack.c.h.b16 %v670
    %v1111 = vunpack.c.l.b16 %v671
    %v1112 = vunpack.c.l.b16 %v672
    %v1113 = vunpack.c.h.b16 %v672
    %v1114 = vunpack.c.l.b16 %v673
    %v1115 = vunpack.c.l.b16 %v674
    %v1116 = vunpack.c.h.b16 %v674
    %v1117 = vunpack.c.l.b16 %v675
    %v1118 = vunpack.c.l.b16 %v676
    %v1119 = vunpack.c.h.b16 %v676
    %v1120 = vunpack.c.l.b16 %v677
    %v1121 = vunpack.c.l.b16 %v678
    %v1122 = vunpack.c.h.b16 %v678
    %v1123 = vunpack.c.l.b16 %v679
    %v1124 = vunpack.c.l.b16 %v680
    %v1125 = vunpack.c.h.b16 %v680
    %v1126 = vunpack.c.l.b16 %v681
    %v1127 = vunpack.c.l.b16 %v682
    %v1128 = vunpack.c.h.b16 %v682
    %v1129 = vunpack.c.l.b16 %v683
    %v1130 = vunpack.c.l.b16 %v684
    %v1131 = vunpack.c.h.b16 %v684
    %v1132 = vunpack.c.l.b16 %v685
    %v1133 = vunpack.c.l.b16 %v686
    %v1134 = vunpack.c.h.b16 %v686
    %v1135 = vunpack.c.l.b16 %v687
    %v1136 = vunpack.c.l.b16 %v688
    %v1137 = vunpack.c.h.b16 %v688
    %v1138 = vunpack.c.l.b16 %v689
    %v1139 = vunpack.c.l.b16 %v690
    %v1140 = vunpack.c.h.b16 %v690
    %v1141 = vunpack.c.l.b16 %v691
    %v1142 = vunpack.c.l.b16 %v692
    %v1143 = vunpack.c.h.b16 %v692
    %v1144 = vunpack.c.l.b16 %v693
    %v1145 = vunpack.c.l.b16 %v694
    %v1146 = vunpack.c.h.b16 %v694
    %v1147 = vunpack.c.l.b16 %v695
    %v1148 = vunpack.c.l.b16 %v696
    %v1149 = vunpack.c.h.b16 %v696
    %v1150 = vunpack.c.l.b16 %v697
    %v1151 = vunpack.c.l.b16 %v698
    %v1152 = vunpack.c.h.b16 %v698
    %v1153 = vunpack.c.l.b16 %v699
    %v1154 = vunpack.c.l.b16 %v700
    %v1155 = vunpack.c.h.b16 %v700
    %v1156 = vunpack.c.l.b16 %v701
    %v1157 = vunpack.c.l.b16 %v702
    %v1158 = vunpack.c.h.b16 %v702
    %v1159 = vunpack.c.l.b16 %v703
    %v1160 = vunpack.c.l.b16 %v704
    %v1161 = vunpack.c.h.b16 %v704
    %v1162 = vunpack.c.l.b16 %v705
    %v1163 = vunpack.c.l.b16 %v706
    %v1164 = vunpack.c.h.b16 %v706
    %v1165 = vunpack.c.l.b16 %v707
    %v1166 = vunpack.c.l.b16 %v708
    %v1167 = vunpack.c.h.b16 %v708
    %v1168 = vunpack.c.l.b16 %v709
    %v1169 = vunpack.c.l.b16 %v710
    %v1170 = vunpack.c.h.b16 %v710
    %v1171 = vunpack.c.l.b16 %v711
    %v1172 = vunpack.c.l.b16 %v712
    %v1173 = vunpack.c.h.b16 %v712
    %v1174 = vunpack.c.l.b16 %v713
    %v1175 = vunpack.c.l.b16 %v714
    %v1176 = vunpack.c.h.b16 %v714
    %v1177 = vunpack.c.l.b16 %v715
    %v1178 = vunpack.c.l.b16 %v716
    %v1179 = vunpack.c.h.b16 %v716
    %v1180 = vunpack.c.l.b16 %v717
    %v1181 = vunpack.c.l.b16 %v718
    %v1182 = vunpack.c.h.b16 %v718
    %v1183 = vunpack.c.l.b16 %v719
    %v1184 = vunpack.c.l.b16 %v720
    %v1185 = vunpack.c.h.b16 %v720
    %v1186 = vunpack.c.l.b16 %v721
    %v1187 = vunpack.c.l.b16 %v722
    %v1188 = vunpack.c.h.b16 %v722
    %v1189 = vunpack.c.l.b16 %v723
    %v1190 = vunpack.c.l.b16 %v724
    %v1191 = vunpack.c.h.b16 %v724
    %v1192 = vunpack.c.l.b16 %v725
    %v1193 = vunpack.c.l.b16 %v726
    %v1194 = vunpack.c.h.b16 %v726
    %v1195 = vunpack.c.l.b16 %v727
    %v1196 = vunpack.c.l.b16 %v728
    %v1197 = vunpack.c.h.b16 %v728
    %v1198 = vunpack.c.l.b16 %v729
    %v1199 = vunpack.c.l.b16 %v730
    %v1200 = vunpack.c.h.b16 %v730
    %v1201 = vunpack.c.l.b16 %v731
    %v1202 = vunpack.c.l.b16 %v732
    %v1203 = vunpack.c.h.b16 %v732
    %v1204 = vunpack.c.l.b16 %v733
    %v1205 = vunpack.c.l.b16 %v734
    %v1206 = vunpack.c.h.b16 %v734
    %v1207 = vunpack.c.l.b16 %v735
    %v1208 = vunpack.c.l.b16 %v736
    %v1209 = vunpack.c.h.b16 %v736
    %v1210 = vunpack.c.l.b16 %v737
    %v1211 = vunpack.c.l.b16 %v738
    %v1212 = vunpack.c.h.b16 %v738
    %v1213 = vunpack.c.l.b16 %v739
    %v1214 = vunpack.c.l.b16 %v740
    %v1215 = vunpack.c.h.b16 %v740
    %v1216 = vunpack.c.l.b16 %v741
    %v1217 = vunpack.c.l.b16 %v742
    %v1218 = vunpack.c.h.b16 %v742
    %v1219 = vunpack.c.l.b16 %v743
    %v1220 = vunpack.c.l.b16 %v744
    %v1221 = vunpack.c.h.b16 %v744
    %v1222 = vunpack.c.l.b16 %v745
    %v1223 = vunpack.c.l.b16 %v746
    %v1224 = vunpack.c.h.b16 %v746
    %v1225 = vunpack.c.l.b16 %v747
    %v1226 = vunpack.c.l.b16 %v748
    %v1227 = vunpack.c.h.b16 %v748
    %v1228 = vunpack.c.l.b16 %v749
    %v1229 = vunpack.c.l.b16 %v750
    %v1230 = vunpack.c.h.b16 %v750
    %v1231 = vunpack.c.l.b16 %v751
    %v1232 = vpack.c.b16 %v947, %v944
    %v1233 = vpack.c.b16 %v948, %v945
    %v1234 = vpack.c.b16 %v949, %v946
    %v1235 = vpack.c.b16 %v953, %v950
    %v1236 = vpack.c.b16 %v954, %v951
    %v1237 = vpack.c.b16 %v955, %v952
    %v1238 = vpack.c.b16 %v959, %v956
    %v1239 = vpack.c.b16 %v960, %v957
    %v1240 = vpack.c.b16 %v961, %v958
    %v1241 = vpack.c.b16 %v965, %v962
    %v1242 = vpack.c.b16 %v966, %v963
    %v1243 = vpack.c.b16 %v967, %v964
    %v1244 = vpack.c.b16 %v971, %v968
    %v1245 = vpack.c.b16 %v972, %v969
    %v1246 = vpack.c.b16 %v973, %v970
    %v1247 = vpack.c.b16 %v977, %v974
    %v1248 = vpack.c.b16 %v978, %v975
    %v1249 = vpack.c.b16 %v979, %v976
    %v1250 = vpack.c.b16 %v983, %v980
    %v1251 = vpack.c.b16 %v984, %v981
    %v1252 = vpack.c.b16 %v985, %v982
    %v1253 = vpack.c.b16 %v989, %v986
    %v1254 = vpack.c.b16 %v990, %v987
    %v1255 = vpack.c.b16 %v991, %v988
    %v1256 = vpack.c.b16 %v995, %v992
    %v1257 = vpack.c.b16 %v996, %v993
    %v1258 = vpack.c.b16 %v997, %v994
    %v1259 = vpack.c.b16 %v1001, %v998
    %v1260 = vpack.c.b16 %v1002, %v999
    %v1261 = vpack.c.b16 %v1003, %v1000
    %v1262 = vpack.c.b16 %v1007, %v1004
    %v1263 = vpack.c.b16 %v1008, %v1005
    %v1264 = vpack.c.b16 %v1009, %v1006
    %v1265 = vpack.c.b16 %v1013, %v1010
    %v1266 = vpack.c.b16 %v1014, %v1011
    %v1267 = vpack.c.b16 %v1015, %v1012
    %v1268 = vpack.c.b16 %v1019, %v1016
    %v1269 = vpack.c.b16 %v1020, %v1017
    %v1270 = vpack.c.b16 %v1021, %v1018
    %v1271 = vpack.c.b16 %v1025, %v1022
    %v1272 = vpack.c.b16 %v1026, %v1023
    %v1273 = vpack.c.b16 %v1027, %v1024
    %v1274 = vpack.c.b16 %v1031, %v1028
    %v1275 = vpack.c.b16 %v1032, %v1029
    %v1276 = vpack.c.b16 %v1033, %v1030
    %v1277 = vpack.c.b16 %v1037, %v1034
    %v1278 = vpack.c.b16 %v1038, %v1035
    %v1279 = vpack.c.b16 %v1039, %v1036
    %v1280 = vpack.c.b16 %v1043, %v1040
    %v1281 = vpack.c.b16 %v1044, %v1041
    %v1282 = vpack.c.b16 %v1045, %v1042
    %v1283 = vpack.c.b16 %v1049, %v1046
    %v1284 = vpack.c.b16 %v1050, %v1047
    %v1285 = vpack.c.b16 %v1051, %v1048
    %v1286 = vpack.c.b16 %v1055, %v1052
    %v1287 = vpack.c.b16 %v1056, %v1053
    %v1288 = vpack.c.b16 %v1057, %v1054
    %v1289 = vpack.c.b16 %v1061, %v1058
    %v1290 = vpack.c.b16 %v1062, %v1059
    %v1291 = vpack.c.b16 %v1063, %v1060
    %v1292 = vpack.c.b16 %v1067, %v1064
    %v1293 = vpack.c.b16 %v1068, %v1065
    %v1294 = vpack.c.b16 %v1069, %v1066
    %v1295 = vpack.c.b16 %v1073, %v1070
    %v1296 = vpack.c.b16 %v1074, %v1071
    %v1297 = vpack.c.b16 %v1075, %v1072
    %v1298 = vpack.c.b16 %v1079, %v1076
    %v1299 = vpack.c.b16 %v1080, %v1077
    %v1300 = vpack.c.b16 %v1081, %v1078
    %v1301 = vpack.c.b16 %v1085, %v1082
    %v1302 = vpack.c.b16 %v1086, %v1083
    %v1303 = vpack.c.b16 %v1087, %v1084
    %v1304 = vpack.c.b16 %v1091, %v1088
    %v1305 = vpack.c.b16 %v1092, %v1089
    %v1306 = vpack.c.b16 %v1093, %v1090
    %v1307 = vpack.c.b16 %v1097, %v1094
    %v1308 = vpack.c.b16 %v1098, %v1095
    %v1309 = vpack.c.b16 %v1099, %v1096
    %v1310 = vpack.c.b16 %v1103, %v1100
    %v1311 = vpack.c.b16 %v1104, %v1101
    %v1312 = vpack.c.b16 %v1105, %v1102
    %v1313 = vpack.c.b16 %v1109, %v1106
    %v1314 = vpack.c.b16 %v1110, %v1107
    %v1315 = vpack.c.b16 %v1111, %v1108
    %v1316 = vpack.c.b16 %v1115, %v1112
    %v1317 = vpack.c.b16 %v1116, %v1113
    %v1318 = vpack.c.b16 %v1117, %v1114
    %v1319 = vpack.c.b16 %v1121, %v1118
    %v1320 = vpack.c.b16 %v1122, %v1119
    %v1321 = vpack.c.b16 %v1123, %v1120
    %v1322 = vpack.c.b16 %v1127, %v1124
    %v1323 = vpack.c.b16 %v1128, %v1125
    %v1324 = vpack.c.b16 %v1129, %v1126
    %v1325 = vpack.c.b16 %v1133, %v1130
    %v1326 = vpack.c.b16 %v1134, %v1131
    %v1327 = vpack.c.b16 %v1135, %v1132
    %v1328 = vpack.c.b16 %v1139, %v1136
    %v1329 = vpack.c.b16 %v1140, %v1137
    %v1330 = vpack.c.b16 %v1141, %v1138
    %v1331 = vpack.c.b16 %v1145, %v1142
    %v1332 = vpack.c.b16 %v1146, %v1143
    %v1333 = vpack.c.b16 %v1147, %v1144
    %v1334 = vpack.c.b16 %v1151, %v1148
    %v1335 = vpack.c.b16 %v1152, %v1149
    %v1336 = vpack.c.b16 %v1153, %v1150
    %v1337 = vpack.c.b16 %v1157, %v1154
    %v1338 = vpack.c.b16 %v1158, %v1155
    %v1339 = vpack.c.b16 %v1159, %v1156
    %v1340 = vpack.c.b16 %v1163, %v1160
    %v1341 = vpack.c.b16 %v1164, %v1161
    %v1342 = vpack.c.b16 %v1165, %v1162
    %v1343 = vpack.c.b16 %v1169, %v1166
    %v1344 = vpack.c.b16 %v1170, %v1167
    %v1345 = vpack.c.b16 %v1171, %v1168
    %v1346 = vpack.c.b16 %v1175, %v1172
    %v1347 = vpack.c.b16 %v1176, %v1173
    %v1348 = vpack.c.b16 %v1177, %v1174
    %v1349 = vpack.c.b16 %v1181, %v1178
    %v1350 = vpack.c.b16 %v1182, %v1179
    %v1351 = vpack.c.b16 %v1183, %v1180
    %v1352 = vpack.c.b16 %v1187, %v1184
    %v1353 = vpack.c.b16 %v1188, %v1185
    %v1354 = vpack.c.b16 %v1189, %v1186
    %v1355 = vpack.c.b16 %v1193, %v1190
    %v1356 = vpack.c.b16 %v1194, %v1191
    %v1357 = vpack.c.b16 %v1195, %v1192
    %v1358 = vpack.c.b16 %v1199, %v1196
    %v1359 = vpack.c.b16 %v1200, %v1197
    %v1360 = vpack.c.b16 %v1201, %v1198
    %v1361 = vpack.c.b16 %v1205, %v1202
    %v1362 = vpack.c.b16 %v1206, %v1203
    %v1363 = vpack.c.b16 %v1207, %v1204
    %v1364 = vpack.c.b16 %v1211, %v1208
    %v1365 = vpack.c.b16 %v1212, %v1209
    %v1366 = vpack.c.b16 %v1213, %v1210
    %v1367 = vpack.c.b16 %v1217, %v1214
    %v1368 = vpack.c.b16 %v1218, %v1215
    %v1369 = vpack.c.b16 %v1219, %v1216
    %v1370 = vpack.c.b16 %v1223, %v1220
    %v1371 = vpack.c.b16 %v1224, %v1221
    %v1372 = vpack.c.b16 %v1225, %v1222
    %v1373 = vpack.c.b16 %v1229, %v1226
    %v1374 = vpack.c.b16 %v1230, %v1227
    %v1375 = vpack.c.b16 %v1231, %v1228
    %1520 = vmatprep.subr.bf16.mxu0 %v1233
    %1521 = vmatpush1.bf16.msra.mxu0 %v1232
    %1522 = vmatprep.subr.bf16.mxu0 %v1236
    %1523 = vmatpush1.bf16.msra.mxu0 %v1235
    %1524 = vmatprep.subr.bf16.mxu0 %v1239
    %1525 = vmatpush1.bf16.msra.mxu0 %v1238
    %1526 = vmatprep.subr.bf16.mxu0 %v1242
    %1527 = vmatpush1.bf16.msra.mxu0 %v1241
    %1528 = vmatprep.subr.bf16.mxu0 %v1245
    %1529 = vmatpush1.bf16.msra.mxu0 %v1244
    %1530 = vmatprep.subr.bf16.mxu0 %v1248
    %1531 = vmatpush1.bf16.msra.mxu0 %v1247
    %1532 = vmatprep.subr.bf16.mxu0 %v1251
    %1533 = vmatpush1.bf16.msra.mxu0 %v1250
    %1534 = vmatprep.subr.bf16.mxu0 %v1254
    %1535 = vmatpush1.bf16.msra.mxu0 %v1253
    %1536 = vmatprep.subr.bf16.mxu0 %v1257
    %1537 = vmatpush1.bf16.msra.mxu0 %v1256
    %1538 = vmatprep.subr.bf16.mxu0 %v1260
    %1539 = vmatpush1.bf16.msra.mxu0 %v1259
    %1540 = vmatprep.subr.bf16.mxu0 %v1263
    %1541 = vmatpush1.bf16.msra.mxu0 %v1262
    %1542 = vmatprep.subr.bf16.mxu0 %v1266
    %1543 = vmatpush1.bf16.msra.mxu0 %v1265
    %1544 = vmatprep.subr.bf16.mxu0 %v1269
    %1545 = vmatpush1.bf16.msra.mxu0 %v1268
    %1546 = vmatprep.subr.bf16.mxu0 %v1272
    %1547 = vmatpush1.bf16.msra.mxu0 %v1271
    %1548 = vmatprep.subr.bf16.mxu0 %v1275
    %1549 = vmatpush1.bf16.msra.mxu0 %v1274
    %1550 = vmatprep.subr.bf16.mxu0 %v1278
    %1551 = vmatpush1.bf16.msra.mxu0 %v1277
    %1552 = vmatprep.mubr.bf16.mxu0 %v555
    %1553 = vmatmul.mubr.bf16.gmra.mrb[0].mxu0 %v554
    %v1554 = vpop.f32.mrb[0].mxu0
    %v1555 = vadd.f32 0.0, %v1554
    %v1556 = vpop.f32.mrb[0].mxu0
    %v1557 = vadd.f32 0.0, %v1556
    %v1558 = vpop.f32.mrb[0].mxu0
    %v1559 = vadd.f32 0.0, %v1558
    %v1560 = vpop.f32.mrb[0].mxu0
    %v1561 = vadd.f32 0.0, %v1560
    %1562 = vdwg.mxu0
    %1563 = vmatprep.subr.bf16.mxu0 %v1281
    %1564 = vmatpush1.bf16.msra.mxu0 %v1280
    %1565 = vmatprep.subr.bf16.mxu0 %v1284
    %1566 = vmatpush1.bf16.msra.mxu0 %v1283
    %1567 = vmatprep.subr.bf16.mxu0 %v1287
    %1568 = vmatpush1.bf16.msra.mxu0 %v1286
    %1569 = vmatprep.subr.bf16.mxu0 %v1290
    %1570 = vmatpush1.bf16.msra.mxu0 %v1289
    %1571 = vmatprep.subr.bf16.mxu0 %v1293
    %1572 = vmatpush1.bf16.msra.mxu0 %v1292
    %1573 = vmatprep.subr.bf16.mxu0 %v1296
    %1574 = vmatpush1.bf16.msra.mxu0 %v1295
    %1575 = vmatprep.subr.bf16.mxu0 %v1299
    %1576 = vmatpush1.bf16.msra.mxu0 %v1298
    %1577 = vmatprep.subr.bf16.mxu0 %v1302
    %1578 = vmatpush1.bf16.msra.mxu0 %v1301
    %1579 = vmatprep.subr.bf16.mxu0 %v1305
    %1580 = vmatpush1.bf16.msra.mxu0 %v1304
    %1581 = vmatprep.subr.bf16.mxu0 %v1308
    %1582 = vmatpush1.bf16.msra.mxu0 %v1307
    %1583 = vmatprep.subr.bf16.mxu0 %v1311
    %1584 = vmatpush1.bf16.msra.mxu0 %v1310
    %1585 = vmatprep.subr.bf16.mxu0 %v1314
    %1586 = vmatpush1.bf16.msra.mxu0 %v1313
    %1587 = vmatprep.subr.bf16.mxu0 %v1317
    %1588 = vmatpush1.bf16.msra.mxu0 %v1316
    %1589 = vmatprep.subr.bf16.mxu0 %v1320
    %1590 = vmatpush1.bf16.msra.mxu0 %v1319
    %1591 = vmatprep.subr.bf16.mxu0 %v1323
    %1592 = vmatpush1.bf16.msra.mxu0 %v1322
    %1593 = vmatprep.subr.bf16.mxu0 %v1326
    %1594 = vmatpush1.bf16.msra.mxu0 %v1325
    %1595 = vmatprep.mubr.bf16.mxu0 %v557
    %1596 = vmatmul.mubr.bf16.gmra.mrb[0].mxu0 %v556
    %v1597 = vpop.f32.mrb[0].mxu0
    %v1598 = vadd.f32 %v1555, %v1597
    %v1599 = vpop.f32.mrb[0].mxu0
    %v1600 = vadd.f32 %v1557, %v1599
    %v1601 = vpop.f32.mrb[0].mxu0
    %v1602 = vadd.f32 %v1559, %v1601
    %v1603 = vpop.f32.mrb[0].mxu0
    %v1604 = vadd.f32 %v1561, %v1603
    %1605 = vdwg.mxu0
    %1606 = vmatprep.subr.bf16.mxu0 %v1329
    %1607 = vmatpush1.bf16.msra.mxu0 %v1328
    %1608 = vmatprep.subr.bf16.mxu0 %v1332
    %1609 = vmatpush1.bf16.msra.mxu0 %v1331
    %1610 = vmatprep.subr.bf16.mxu0 %v1335
    %1611 = vmatpush1.bf16.msra.mxu0 %v1334
    %1612 = vmatprep.subr.bf16.mxu0 %v1338
    %1613 = vmatpush1.bf16.msra.mxu0 %v1337
    %1614 = vmatprep.subr.bf16.mxu0 %v1341
    %1615 = vmatpush1.bf16.msra.mxu0 %v1340
    %1616 = vmatprep.subr.bf16.mxu0 %v1344
    %1617 = vmatpush1.bf16.msra.mxu0 %v1343
    %1618 = vmatprep.subr.bf16.mxu0 %v1347
    %1619 = vmatpush1.bf16.msra.mxu0 %v1346
    %1620 = vmatprep.subr.bf16.mxu0 %v1350
    %1621 = vmatpush1.bf16.msra.mxu0 %v1349
    %1622 = vmatprep.subr.bf16.mxu0 %v1353
    %1623 = vmatpush1.bf16.msra.mxu0 %v1352
    %1624 = vmatprep.subr.bf16.mxu0 %v1356
    %1625 = vmatpush1.bf16.msra.mxu0 %v1355
    %1626 = vmatprep.subr.bf16.mxu0 %v1359
    %1627 = vmatpush1.bf16.msra.mxu0 %v1358
    %1628 = vmatprep.subr.bf16.mxu0 %v1362
    %1629 = vmatpush1.bf16.msra.mxu0 %v1361
    %1630 = vmatprep.subr.bf16.mxu0 %v1365
    %1631 = vmatpush1.bf16.msra.mxu0 %v1364
    %1632 = vmatprep.subr.bf16.mxu0 %v1368
    %1633 = vmatpush1.bf16.msra.mxu0 %v1367
    %1634 = vmatprep.subr.bf16.mxu0 %v1371
    %1635 = vmatpush1.bf16.msra.mxu0 %v1370
    %1636 = vmatprep.subr.bf16.mxu0 %v1374
    %1637 = vmatpush1.bf16.msra.mxu0 %v1373
    %1638 = vmatprep.mubr.bf16.mxu0 %v559
    %1639 = vmatmul.mubr.bf16.gmra.mrb[0].mxu0 %v558
    %v1640 = vpop.f32.mrb[0].mxu0
    %v1641 = vadd.f32 %v1598, %v1640
    %v1642 = vpop.f32.mrb[0].mxu0
    %v1643 = vadd.f32 %v1600, %v1642
    %v1644 = vpop.f32.mrb[0].mxu0
    %v1645 = vadd.f32 %v1602, %v1644
    %v1646 = vpop.f32.mrb[0].mxu0
    %v1647 = vadd.f32 %v1604, %v1646
    %1648 = vdwg.mxu0
    %1649 = vmatprep.subr.bf16.mxu0 0
    %1650 = vmatpush1.bf16.msra.mxu0 %v1234
    %1651 = vmatprep.subr.bf16.mxu0 0
    %1652 = vmatpush1.bf16.msra.mxu0 %v1237
    %1653 = vmatprep.subr.bf16.mxu0 0
    %1654 = vmatpush1.bf16.msra.mxu0 %v1240
    %1655 = vmatprep.subr.bf16.mxu0 0
    %1656 = vmatpush1.bf16.msra.mxu0 %v1243
    %1657 = vmatprep.subr.bf16.mxu0 0
    %1658 = vmatpush1.bf16.msra.mxu0 %v1246
    %1659 = vmatprep.subr.bf16.mxu0 0
    %1660 = vmatpush1.bf16.msra.mxu0 %v1249
    %1661 = vmatprep.subr.bf16.mxu0 0
    %1662 = vmatpush1.bf16.msra.mxu0 %v1252
    %1663 = vmatprep.subr.bf16.mxu0 0
    %1664 = vmatpush1.bf16.msra.mxu0 %v1255
    %1665 = vmatprep.subr.bf16.mxu0 0
    %1666 = vmatpush1.bf16.msra.mxu0 %v1258
    %1667 = vmatprep.subr.bf16.mxu0 0
    %1668 = vmatpush1.bf16.msra.mxu0 %v1261
    %1669 = vmatprep.subr.bf16.mxu0 0
    %1670 = vmatpush1.bf16.msra.mxu0 %v1264
    %1671 = vmatprep.subr.bf16.mxu0 0
    %1672 = vmatpush1.bf16.msra.mxu0 %v1267
    %1673 = vmatprep.subr.bf16.mxu0 0
    %1674 = vmatpush1.bf16.msra.mxu0 %v1270
    %1675 = vmatprep.subr.bf16.mxu0 0
    %1676 = vmatpush1.bf16.msra.mxu0 %v1273
    %1677 = vmatprep.subr.bf16.mxu0 0
    %1678 = vmatpush1.bf16.msra.mxu0 %v1276
    %1679 = vmatprep.subr.bf16.mxu0 0
    %1680 = vmatpush1.bf16.msra.mxu0 %v1279
    %1681 = vmatprep.mubr.bf16.mxu0 %v555
    %1682 = vmatmul.mubr.bf16.gmra.mrb[0].mxu0 %v554
    %v1683 = vpop.f32.mrb[0].mxu0
    %v1684 = vadd.f32 0.0, %v1683
    %v1685 = vpop.f32.mrb[0].mxu0
    %v1686 = vpop.f32.mrb[0].mxu0
    %v1687 = vadd.f32 0.0, %v1686
    %v1688 = vpop.f32.mrb[0].mxu0
    %1689 = vdwg.mxu0
    %1690 = vmatprep.subr.bf16.mxu0 0
    %1691 = vmatpush1.bf16.msra.mxu0 %v1282
    %1692 = vmatprep.subr.bf16.mxu0 0
    %1693 = vmatpush1.bf16.msra.mxu0 %v1285
    %1694 = vmatprep.subr.bf16.mxu0 0
    %1695 = vmatpush1.bf16.msra.mxu0 %v1288
    %1696 = vmatprep.subr.bf16.mxu0 0
    %1697 = vmatpush1.bf16.msra.mxu0 %v1291
    %1698 = vmatprep.subr.bf16.mxu0 0
    %1699 = vmatpush1.bf16.msra.mxu0 %v1294
    %1700 = vmatprep.subr.bf16.mxu0 0
    %1701 = vmatpush1.bf16.msra.mxu0 %v1297
    %1702 = vmatprep.subr.bf16.mxu0 0
    %1703 = vmatpush1.bf16.msra.mxu0 %v1300
    %1704 = vmatprep.subr.bf16.mxu0 0
    %1705 = vmatpush1.bf16.msra.mxu0 %v1303
    %1706 = vmatprep.subr.bf16.mxu0 0
    %1707 = vmatpush1.bf16.msra.mxu0 %v1306
    %1708 = vmatprep.subr.bf16.mxu0 0
    %1709 = vmatpush1.bf16.msra.mxu0 %v1309
    %1710 = vmatprep.subr.bf16.mxu0 0
    %1711 = vmatpush1.bf16.msra.mxu0 %v1312
    %1712 = vmatprep.subr.bf16.mxu0 0
    %1713 = vmatpush1.bf16.msra.mxu0 %v1315
    %1714 = vmatprep.subr.bf16.mxu0 0
    %1715 = vmatpush1.bf16.msra.mxu0 %v1318
    %1716 = vmatprep.subr.bf16.mxu0 0
    %1717 = vmatpush1.bf16.msra.mxu0 %v1321
    %1718 = vmatprep.subr.bf16.mxu0 0
    %1719 = vmatpush1.bf16.msra.mxu0 %v1324
    %1720 = vmatprep.subr.bf16.mxu0 0
    %1721 = vmatpush1.bf16.msra.mxu0 %v1327
    %1722 = vmatprep.mubr.bf16.mxu0 %v557
    %1723 = vmatmul.mubr.bf16.gmra.mrb[0].mxu0 %v556
    %v1724 = vpop.f32.mrb[0].mxu0
    %v1725 = vadd.f32 %v1684, %v1724
    %v1726 = vpop.f32.mrb[0].mxu0
    %v1727 = vpop.f32.mrb[0].mxu0
    %v1728 = vadd.f32 %v1687, %v1727
    %v1729 = vpop.f32.mrb[0].mxu0
    %1730 = vdwg.mxu0
    %1731 = vmatprep.subr.bf16.mxu0 0
    %1732 = vmatpush1.bf16.msra.mxu0 %v1330
    %1733 = vmatprep.subr.bf16.mxu0 0
    %1734 = vmatpush1.bf16.msra.mxu0 %v1333
    %1735 = vmatprep.subr.bf16.mxu0 0
    %1736 = vmatpush1.bf16.msra.mxu0 %v1336
    %1737 = vmatprep.subr.bf16.mxu0 0
    %1738 = vmatpush1.bf16.msra.mxu0 %v1339
    %1739 = vmatprep.subr.bf16.mxu0 0
    %1740 = vmatpush1.bf16.msra.mxu0 %v1342
    %1741 = vmatprep.subr.bf16.mxu0 0
    %1742 = vmatpush1.bf16.msra.mxu0 %v1345
    %1743 = vmatprep.subr.bf16.mxu0 0
    %1744 = vmatpush1.bf16.msra.mxu0 %v1348
    %1745 = vmatprep.subr.bf16.mxu0 0
    %1746 = vmatpush1.bf16.msra.mxu0 %v1351
    %1747 = vmatprep.subr.bf16.mxu0 0
    %1748 = vmatpush1.bf16.msra.mxu0 %v1354
    %1749 = vmatprep.subr.bf16.mxu0 0
    %1750 = vmatpush1.bf16.msra.mxu0 %v1357
    %1751 = vmatprep.subr.bf16.mxu0 0
    %1752 = vmatpush1.bf16.msra.mxu0 %v1360
    %1753 = vmatprep.subr.bf16.mxu0 0
    %1754 = vmatpush1.bf16.msra.mxu0 %v1363
    %1755 = vmatprep.subr.bf16.mxu0 0
    %1756 = vmatpush1.bf16.msra.mxu0 %v1366
    %1757 = vmatprep.subr.bf16.mxu0 0
    %1758 = vmatpush1.bf16.msra.mxu0 %v1369
    %1759 = vmatprep.subr.bf16.mxu0 0
    %1760 = vmatpush1.bf16.msra.mxu0 %v1372
    %1761 = vmatprep.subr.bf16.mxu0 0
    %1762 = vmatpush1.bf16.msra.mxu0 %v1375
    %1763 = vmatprep.mubr.bf16.mxu0 %v559
    %1764 = vmatmul.mubr.bf16.gmra.mrb[0].mxu0 %v558
    %v1765 = vpop.f32.mrb[0].mxu0
    %v1766 = vadd.f32 %v1725, %v1765
    %v1767 = vpop.f32.mrb[0].mxu0
    %v1768 = vpop.f32.mrb[0].mxu0
    %v1769 = vadd.f32 %v1728, %v1768
    %v1770 = vpop.f32.mrb[0].mxu0
    %1771 = vdwg.mxu0
    %v1772 = vpack.c.bf16 %v1645, %v1641
    %v1773 = vpack.c.bf16 %v1647, %v1643
    %v1774 = vpack.c.bf16 %v1769, %v1766
    %v1775 = vld [vmem:[%s3] sm:$0x7]
    %v1778 = vunpack.c.l.s4 1966171168
    %v1779 = vunpack.c.0.s8 %v1778
    %v1780 = vlaneseq
    %v1781 = vshrl.u32 %v1780, 7
    %v1782 = vsub.s32 %v1779, %v1781
    %v1783 = vrot.slane %v1775, %v1782
    %v1784 = vcombine.high %v1783, %v1783
    %v1786 = vunpack.c.l.s4 1966171168
    %v1787 = vunpack.c.0.s8 %v1786
    %v1788 = vlaneseq
    %v1789 = vshrl.u32 %v1788, 7
    %v1790 = vsub.s32 %v1787, %v1789
    %v1791 = vrot.slane %v1783, %v1790
    %v1793 = vunpack.c.l.s4 1966171168
    %v1794 = vunpack.c.0.s8 %v1793
    %v1795 = vlaneseq
    %v1796 = vshrl.u32 %v1795, 7
    %v1797 = vsub.s32 %v1794, %v1796
    %v1798 = vrot.slane %v1784, %v1797
    %v1799 = vcombine.high %v1791, %v1791
    %v1801 = vpack.i.b16 %v1791, %v1791
    %v1803 = vlaneseq
    %v1804 = vshrl.u32 %v1803, 7
    %v1805 = vsub.s32 0, %v1804
    %v1806 = vrot.slane %v1801, %v1805
    %v1808 = vpack.i.b16 %v1798, %v1798
    %v1810 = vlaneseq
    %v1811 = vshrl.u32 %v1810, 7
    %v1812 = vsub.s32 0, %v1811
    %v1813 = vrot.slane %v1808, %v1812
    %v1815 = vpack.i.b16 %v1799, %v1799
    %v1817 = vlaneseq
    %v1818 = vshrl.u32 %v1817, 7
    %v1819 = vsub.s32 0, %v1818
    %v1820 = vrot.slane %v1815, %v1819
    %v1821 = vadd.bf16 %v1772, %v1806
    %v1822 = vadd.bf16 %v1773, %v1813
    %v1823 = vadd.bf16 %v1774, %v1820
    %v1824 = vmul.bf16 %v1821, 1036860877
    %v1825 = vmul.bf16 %v1822, 1036860877
    %v1826 = vmul.bf16 %v1823, 1036860877
    %v1827 = vmax.bf16 %v1821, %v1824
    %v1828 = vmax.bf16 %v1822, %v1825
    %v1829 = vmax.bf16 %v1823, %v1826
    %v1830 = vld [vmem:[#allocation8] sm:$0xf]
    %v1831 = vld [vmem:[#allocation8 + $0x4] sm:$0xf]
    %v1832 = vld [vmem:[#allocation8 + $0x8] sm:$0xf]
    %v1833 = vld [vmem:[#allocation8 + $0xc] sm:$0xf]
    %v1834 = vld [vmem:[#allocation8 + $0x10] sm:$0xf]
    %v1835 = vld [vmem:[#allocation8 + $0x14] sm:$0xf]
    %v1836 = vld [vmem:[#allocation8 + $0x18] sm:$0xf]
    %v1837 = vld [vmem:[#allocation8 + $0x1c] sm:$0xf]
    %v1838 = vld [vmem:[#allocation8 + $0x20] sm:$0xf]
    %v1839 = vld [vmem:[#allocation8 + $0x24] sm:$0xf]
    %v1840 = vld [vmem:[#allocation8 + $0x28] sm:$0xf]
    %v1841 = vld [vmem:[#allocation8 + $0x2c] sm:$0xf]
    %v1842 = vld [vmem:[#allocation8 + $0x30] sm:$0xf]
    %v1843 = vld [vmem:[#allocation8 + $0x34] sm:$0xf]
    %v1844 = vld [vmem:[#allocation8 + $0x38] sm:$0xf]
    %v1845 = vld [vmem:[#allocation8 + $0x3c] sm:$0xf]
    %v1846 = vld [vmem:[#allocation8 + $0x40] sm:$0xf]
    %v1847 = vld [vmem:[#allocation8 + $0x44] sm:$0xf]
    %v1848 = vld [vmem:[#allocation8 + $0x48] sm:$0xf]
    %v1849 = vld [vmem:[#allocation8 + $0x4c] sm:$0xf]
    %v1850 = vld [vmem:[#allocation8 + $0x50] sm:$0xf]
    %v1851 = vld [vmem:[#allocation8 + $0x54] sm:$0xf]
    %v1852 = vld [vmem:[#allocation8 + $0x58] sm:$0xf]
    %v1853 = vld [vmem:[#allocation8 + $0x5c] sm:$0xf]
    %v1854 = vld [vmem:[#allocation8 + $0x60] sm:$0xf]
    %v1855 = vld [vmem:[#allocation8 + $0x64] sm:$0xf]
    %v1856 = vld [vmem:[#allocation8 + $0x68] sm:$0xf]
    %v1857 = vld [vmem:[#allocation8 + $0x6c] sm:$0xf]
    %v1858 = vld [vmem:[#allocation8 + $0x70] sm:$0xf]
    %v1859 = vld [vmem:[#allocation8 + $0x74] sm:$0xf]
    %v1860 = vld [vmem:[#allocation8 + $0x78] sm:$0xf]
    %v1861 = vld [vmem:[#allocation8 + $0x7c] sm:$0xf]
    %v1862 = vld [vmem:[#allocation8 + $0x80] sm:$0xf]
    %v1863 = vld [vmem:[#allocation8 + $0x84] sm:$0xf]
    %v1864 = vld [vmem:[#allocation8 + $0x88] sm:$0xf]
    %v1865 = vld [vmem:[#allocation8 + $0x8c] sm:$0xf]
    %v1866 = vld [vmem:[#allocation8 + $0x90] sm:$0xf]
    %v1867 = vld [vmem:[#allocation8 + $0x94] sm:$0xf]
    %v1868 = vld [vmem:[#allocation8 + $0x98] sm:$0xf]
    %v1869 = vld [vmem:[#allocation8 + $0x9c] sm:$0xf]
    %v1870 = vld [vmem:[#allocation8 + $0xa0] sm:$0xf]
    %v1871 = vld [vmem:[#allocation8 + $0xa4] sm:$0xf]
    %v1872 = vld [vmem:[#allocation8 + $0xa8] sm:$0xf]
    %v1873 = vld [vmem:[#allocation8 + $0xac] sm:$0xf]
    %v1874 = vld [vmem:[#allocation8 + $0xb0] sm:$0xf]
    %v1875 = vld [vmem:[#allocation8 + $0xb4] sm:$0xf]
    %v1876 = vld [vmem:[#allocation8 + $0xb8] sm:$0xf]
    %v1877 = vld [vmem:[#allocation8 + $0xbc] sm:$0xf]
    %v1926 = vunpack.c.l.b16 %v1830
    %v1927 = vunpack.c.l.b16 %v1831
    %v1928 = vunpack.c.l.b16 %v1832
    %v1929 = vunpack.c.l.b16 %v1833
    %v1930 = vunpack.c.l.b16 %v1834
    %v1931 = vunpack.c.l.b16 %v1835
    %v1932 = vunpack.c.l.b16 %v1836
    %v1933 = vunpack.c.l.b16 %v1837
    %v1934 = vunpack.c.l.b16 %v1838
    %v1935 = vunpack.c.l.b16 %v1839
    %v1936 = vunpack.c.l.b16 %v1840
    %v1937 = vunpack.c.l.b16 %v1841
    %v1938 = vunpack.c.l.b16 %v1842
    %v1939 = vunpack.c.l.b16 %v1843
    %v1940 = vunpack.c.l.b16 %v1844
    %v1941 = vunpack.c.l.b16 %v1845
    %v1942 = vunpack.c.l.b16 %v1846
    %v1943 = vunpack.c.l.b16 %v1847
    %v1944 = vunpack.c.l.b16 %v1848
    %v1945 = vunpack.c.l.b16 %v1849
    %v1946 = vunpack.c.l.b16 %v1850
    %v1947 = vunpack.c.l.b16 %v1851
    %v1948 = vunpack.c.l.b16 %v1852
    %v1949 = vunpack.c.l.b16 %v1853
    %v1950 = vunpack.c.l.b16 %v1854
    %v1951 = vunpack.c.l.b16 %v1855
    %v1952 = vunpack.c.l.b16 %v1856
    %v1953 = vunpack.c.l.b16 %v1857
    %v1954 = vunpack.c.l.b16 %v1858
    %v1955 = vunpack.c.l.b16 %v1859
    %v1956 = vunpack.c.l.b16 %v1860
    %v1957 = vunpack.c.l.b16 %v1861
    %v1958 = vunpack.c.l.b16 %v1862
    %v1959 = vunpack.c.l.b16 %v1863
    %v1960 = vunpack.c.l.b16 %v1864
    %v1961 = vunpack.c.l.b16 %v1865
    %v1962 = vunpack.c.l.b16 %v1866
    %v1963 = vunpack.c.l.b16 %v1867
    %v1964 = vunpack.c.l.b16 %v1868
    %v1965 = vunpack.c.l.b16 %v1869
    %v1966 = vunpack.c.l.b16 %v1870
    %v1967 = vunpack.c.l.b16 %v1871
    %v1968 = vunpack.c.l.b16 %v1872
    %v1969 = vunpack.c.l.b16 %v1873
    %v1970 = vunpack.c.l.b16 %v1874
    %v1971 = vunpack.c.l.b16 %v1875
    %v1972 = vunpack.c.l.b16 %v1876
    %v1973 = vunpack.c.l.b16 %v1877
    %v1974 = vpack.c.b16 %v1927, %v1926
    %v1975 = vpack.c.b16 %v1929, %v1928
    %v1976 = vpack.c.b16 %v1931, %v1930
    %v1977 = vpack.c.b16 %v1933, %v1932
    %v1978 = vpack.c.b16 %v1935, %v1934
    %v1979 = vpack.c.b16 %v1937, %v1936
    %v1980 = vpack.c.b16 %v1939, %v1938
    %v1981 = vpack.c.b16 %v1941, %v1940
    %v1982 = vpack.c.b16 %v1943, %v1942
    %v1983 = vpack.c.b16 %v1945, %v1944
    %v1984 = vpack.c.b16 %v1947, %v1946
    %v1985 = vpack.c.b16 %v1949, %v1948
    %v1986 = vpack.c.b16 %v1951, %v1950
    %v1987 = vpack.c.b16 %v1953, %v1952
    %v1988 = vpack.c.b16 %v1955, %v1954
    %v1989 = vpack.c.b16 %v1957, %v1956
    %v1990 = vpack.c.b16 %v1959, %v1958
    %v1991 = vpack.c.b16 %v1961, %v1960
    %v1992 = vpack.c.b16 %v1963, %v1962
    %v1993 = vpack.c.b16 %v1965, %v1964
    %v1994 = vpack.c.b16 %v1967, %v1966
    %v1995 = vpack.c.b16 %v1969, %v1968
    %v1996 = vpack.c.b16 %v1971, %v1970
    %v1997 = vpack.c.b16 %v1973, %v1972
    %2022 = vmatprep.subr.bf16.mxu0 0
    %2023 = vmatpush1.bf16.msra.mxu0 %v1974
    %2024 = vmatprep.subr.bf16.mxu0 0
    %2025 = vmatpush1.bf16.msra.mxu0 %v1975
    %2026 = vmatprep.subr.bf16.mxu0 0
    %2027 = vmatpush1.bf16.msra.mxu0 %v1976
    %2028 = vmatprep.subr.bf16.mxu0 0
    %2029 = vmatpush1.bf16.msra.mxu0 %v1977
    %2030 = vmatprep.subr.bf16.mxu0 0
    %2031 = vmatpush1.bf16.msra.mxu0 %v1978
    %2032 = vmatprep.subr.bf16.mxu0 0
    %2033 = vmatpush1.bf16.msra.mxu0 %v1979
    %2034 = vmatprep.subr.bf16.mxu0 0
    %2035 = vmatpush1.bf16.msra.mxu0 %v1980
    %2036 = vmatprep.subr.bf16.mxu0 0
    %2037 = vmatpush1.bf16.msra.mxu0 %v1981
    %2038 = vmatprep.subr.bf16.mxu0 0
    %2039 = vmatpush1.bf16.msra.mxu0 %v1982
    %2040 = vmatprep.subr.bf16.mxu0 0
    %2041 = vmatpush1.bf16.msra.mxu0 %v1983
    %2042 = vmatprep.subr.bf16.mxu0 0
    %2043 = vmatpush1.bf16.msra.mxu0 %v1984
    %2044 = vmatprep.subr.bf16.mxu0 0
    %2045 = vmatpush1.bf16.msra.mxu0 %v1985
    %2046 = vmatprep.subr.bf16.mxu0 0
    %2047 = vmatpush1.bf16.msra.mxu0 %v1986
    %2048 = vmatprep.subr.bf16.mxu0 0
    %2049 = vmatpush1.bf16.msra.mxu0 %v1987
    %2050 = vmatprep.subr.bf16.mxu0 0
    %2051 = vmatpush1.bf16.msra.mxu0 %v1988
    %2052 = vmatprep.subr.bf16.mxu0 0
    %2053 = vmatpush1.bf16.msra.mxu0 %v1989
    %2054 = vmatprep.mubr.bf16.mxu0 %v1828
    %2055 = vmatmul.mubr.bf16.gmra.mrb[0].mxu0 %v1827
    %v2056 = vpop.f32.mrb[0].mxu0
    %v2057 = vadd.f32 0.0, %v2056
    %v2058 = vpop.f32.mrb[0].mxu0
    %v2059 = vpop.f32.mrb[0].mxu0
    %v2060 = vadd.f32 0.0, %v2059
    %v2061 = vpop.f32.mrb[0].mxu0
    %2062 = vdwg.mxu0
    %2063 = vmatprep.subr.bf16.mxu0 0
    %2064 = vmatpush1.bf16.msra.mxu0 %v1990
    %2065 = vmatprep.subr.bf16.mxu0 0
    %2066 = vmatpush1.bf16.msra.mxu0 %v1991
    %2067 = vmatprep.subr.bf16.mxu0 0
    %2068 = vmatpush1.bf16.msra.mxu0 %v1992
    %2069 = vmatprep.subr.bf16.mxu0 0
    %2070 = vmatpush1.bf16.msra.mxu0 %v1993
    %2071 = vmatprep.subr.bf16.mxu0 0
    %2072 = vmatpush1.bf16.msra.mxu0 %v1994
    %2073 = vmatprep.subr.bf16.mxu0 0
    %2074 = vmatpush1.bf16.msra.mxu0 %v1995
    %2075 = vmatprep.subr.bf16.mxu0 0
    %2076 = vmatpush1.bf16.msra.mxu0 %v1996
    %2077 = vmatprep.subr.bf16.mxu0 0
    %2078 = vmatpush1.bf16.msra.mxu0 %v1997
    %2079 = vmatprep.subr.bf16.mxu0 0
    %2080 = vmatpush1.bf16.msra.mxu0 0
    %2081 = vmatprep.subr.bf16.mxu0 0
    %2082 = vmatpush1.bf16.msra.mxu0 0
    %2083 = vmatprep.subr.bf16.mxu0 0
    %2084 = vmatpush1.bf16.msra.mxu0 0
    %2085 = vmatprep.subr.bf16.mxu0 0
    %2086 = vmatpush1.bf16.msra.mxu0 0
    %2087 = vmatprep.subr.bf16.mxu0 0
    %2088 = vmatpush1.bf16.msra.mxu0 0
    %2089 = vmatprep.subr.bf16.mxu0 0
    %2090 = vmatpush1.bf16.msra.mxu0 0
    %2091 = vmatprep.subr.bf16.mxu0 0
    %2092 = vmatpush1.bf16.msra.mxu0 0
    %2093 = vmatprep.subr.bf16.mxu0 0
    %2094 = vmatpush1.bf16.msra.mxu0 0
    %2095 = vmatprep.mubr.bf16.mxu0 0
    %2096 = vmatmul.mubr.bf16.gmra.mrb[0].mxu0 %v1829
    %v2097 = vpop.f32.mrb[0].mxu0
    %v2098 = vadd.f32 %v2057, %v2097
    %v2099 = vpop.f32.mrb[0].mxu0
    %v2100 = vpop.f32.mrb[0].mxu0
    %v2101 = vadd.f32 %v2060, %v2100
    %v2102 = vpop.f32.mrb[0].mxu0
    %2103 = vdwg.mxu0
    %v2104 = vpack.c.bf16 %v2101, %v2098
    %v2105 = vld [vmem:[%s5] sm:$0x1]
    %v2107 = vpack.i.b16 %v2105, %v2105
    %v2109 = vlaneseq
    %v2110 = vshrl.u32 %v2109, 7
    %v2111 = vsub.s32 0, %v2110
    %v2112 = vrot.slane %v2107, %v2111
    %v2113 = vadd.bf16 %v2104, %v2112
    %v2114 = vmul.bf16 %v2113, 1036860877
    %v2115 = vmax.bf16 %v2113, %v2114
    %v2116 = vld [vmem:[#allocation10] sm:$0xf]
    %v2117 = vld [vmem:[#allocation10 + $0x4] sm:$0xf]
    %v2118 = vld [vmem:[#allocation10 + $0x8] sm:$0xf]
    %v2119 = vld [vmem:[#allocation10 + $0xc] sm:$0xf]
    %v2120 = vld [vmem:[#allocation10 + $0x10] sm:$0xf]
    %v2121 = vld [vmem:[#allocation10 + $0x14] sm:$0xf]
    %v2122 = vld [vmem:[#allocation10 + $0x18] sm:$0xf]
    %v2123 = vld [vmem:[#allocation10 + $0x1c] sm:$0xf]
    %v2124 = vld [vmem:[#allocation10 + $0x20] sm:$0xf]
    %v2125 = vld [vmem:[#allocation10 + $0x24] sm:$0xf]
    %v2126 = vld [vmem:[#allocation10 + $0x28] sm:$0xf]
    %v2127 = vld [vmem:[#allocation10 + $0x2c] sm:$0xf]
    %v2128 = vld [vmem:[#allocation10 + $0x30] sm:$0xf]
    %v2129 = vld [vmem:[#allocation10 + $0x34] sm:$0xf]
    %v2130 = vld [vmem:[#allocation10 + $0x38] sm:$0xf]
    %v2131 = vld [vmem:[#allocation10 + $0x3c] sm:$0xf]
    %v2148 = vunpack.c.l.b16 %v2116
    %v2149 = vunpack.c.l.b16 %v2117
    %v2150 = vunpack.c.l.b16 %v2118
    %v2151 = vunpack.c.l.b16 %v2119
    %v2152 = vunpack.c.l.b16 %v2120
    %v2153 = vunpack.c.l.b16 %v2121
    %v2154 = vunpack.c.l.b16 %v2122
    %v2155 = vunpack.c.l.b16 %v2123
    %v2156 = vunpack.c.l.b16 %v2124
    %v2157 = vunpack.c.l.b16 %v2125
    %v2158 = vunpack.c.l.b16 %v2126
    %v2159 = vunpack.c.l.b16 %v2127
    %v2160 = vunpack.c.l.b16 %v2128
    %v2161 = vunpack.c.l.b16 %v2129
    %v2162 = vunpack.c.l.b16 %v2130
    %v2163 = vunpack.c.l.b16 %v2131
    %v2164 = vpack.c.b16 %v2149, %v2148
    %v2165 = vpack.c.b16 %v2151, %v2150
    %v2166 = vpack.c.b16 %v2153, %v2152
    %v2167 = vpack.c.b16 %v2155, %v2154
    %v2168 = vpack.c.b16 %v2157, %v2156
    %v2169 = vpack.c.b16 %v2159, %v2158
    %v2170 = vpack.c.b16 %v2161, %v2160
    %v2171 = vpack.c.b16 %v2163, %v2162
    %2180 = vmatprep.subr.bf16.mxu0 0
    %2181 = vmatpush1.bf16.msra.mxu0 %v2164
    %2182 = vmatprep.subr.bf16.mxu0 0
    %2183 = vmatpush1.bf16.msra.mxu0 %v2165
    %2184 = vmatprep.subr.bf16.mxu0 0
    %2185 = vmatpush1.bf16.msra.mxu0 %v2166
    %2186 = vmatprep.subr.bf16.mxu0 0
    %2187 = vmatpush1.bf16.msra.mxu0 %v2167
    %2188 = vmatprep.subr.bf16.mxu0 0
    %2189 = vmatpush1.bf16.msra.mxu0 %v2168
    %2190 = vmatprep.subr.bf16.mxu0 0
    %2191 = vmatpush1.bf16.msra.mxu0 %v2169
    %2192 = vmatprep.subr.bf16.mxu0 0
    %2193 = vmatpush1.bf16.msra.mxu0 %v2170
    %2194 = vmatprep.subr.bf16.mxu0 0
    %2195 = vmatpush1.bf16.msra.mxu0 %v2171
    %2196 = vmatprep.subr.bf16.mxu0 0
    %2197 = vmatpush1.bf16.msra.mxu0 0
    %2198 = vmatprep.subr.bf16.mxu0 0
    %2199 = vmatpush1.bf16.msra.mxu0 0
    %2200 = vmatprep.subr.bf16.mxu0 0
    %2201 = vmatpush1.bf16.msra.mxu0 0
    %2202 = vmatprep.subr.bf16.mxu0 0
    %2203 = vmatpush1.bf16.msra.mxu0 0
    %2204 = vmatprep.subr.bf16.mxu0 0
    %2205 = vmatpush1.bf16.msra.mxu0 0
    %2206 = vmatprep.subr.bf16.mxu0 0
    %2207 = vmatpush1.bf16.msra.mxu0 0
    %2208 = vmatprep.subr.bf16.mxu0 0
    %2209 = vmatpush1.bf16.msra.mxu0 0
    %2210 = vmatprep.subr.bf16.mxu0 0
    %2211 = vmatpush1.bf16.msra.mxu0 0
    %2212 = vmatprep.mubr.bf16.mxu0 0
    %2213 = vmatmul.mubr.bf16.gmra.mrb[0].mxu0 %v2115
    %v2214 = vpop.f32.mrb[0].mxu0
    %v2215 = vadd.f32 0.0, %v2214
    %v2216 = vpop.f32.mrb[0].mxu0
    %v2217 = vpop.f32.mrb[0].mxu0
    %v2218 = vadd.f32 0.0, %v2217
    %v2219 = vpop.f32.mrb[0].mxu0
    %2220 = vdwg.mxu0
    %v2221 = vpack.c.bf16 %v2218, %v2215
    %v2222 = vld [vmem:[%s7] sm:$0x1]
    %v2224 = vpack.i.b16 %v2222, %v2222
    %v2226 = vlaneseq
    %v2227 = vshrl.u32 %v2226, 7
    %v2228 = vsub.s32 0, %v2227
    %v2229 = vrot.slane %v2224, %v2228
    %v2230 = vadd.bf16 %v2221, %v2229
    %v2231 = vmul.bf16 %v2230, 1036860877
    %v2232 = vmax.bf16 %v2230, %v2231
    %v2233 = vld [vmem:[#allocation11] sm:$0xf]
    %v2234 = vld [vmem:[#allocation11 + $0x4] sm:$0xf]
    %v2235 = vld [vmem:[#allocation11 + $0x8] sm:$0xf]
    %v2236 = vld [vmem:[#allocation11 + $0xc] sm:$0xf]
    %v2237 = vld [vmem:[#allocation11 + $0x10] sm:$0xf]
    %v2238 = vld [vmem:[#allocation11 + $0x14] sm:$0xf]
    %v2239 = vld [vmem:[#allocation11 + $0x18] sm:$0xf]
    %v2240 = vld [vmem:[#allocation11 + $0x1c] sm:$0xf]
    %v2241 = vld [vmem:[#allocation11 + $0x20] sm:$0xf]
    %v2242 = vld [vmem:[#allocation11 + $0x24] sm:$0xf]
    %v2243 = vld [vmem:[#allocation11 + $0x28] sm:$0xf]
    %v2244 = vld [vmem:[#allocation11 + $0x2c] sm:$0xf]
    %v2245 = vld [vmem:[#allocation11 + $0x30] sm:$0xf]
    %v2246 = vld [vmem:[#allocation11 + $0x34] sm:$0xf]
    %v2247 = vld [vmem:[#allocation11 + $0x38] sm:$0xf]
    %v2248 = vld [vmem:[#allocation11 + $0x3c] sm:$0xf]
    %v2265 = vunpack.c.l.b16 %v2233
    %v2266 = vunpack.c.l.b16 %v2234
    %v2267 = vunpack.c.l.b16 %v2235
    %v2268 = vunpack.c.l.b16 %v2236
    %v2269 = vunpack.c.l.b16 %v2237
    %v2270 = vunpack.c.l.b16 %v2238
    %v2271 = vunpack.c.l.b16 %v2239
    %v2272 = vunpack.c.l.b16 %v2240
    %v2273 = vunpack.c.l.b16 %v2241
    %v2274 = vunpack.c.l.b16 %v2242
    %v2275 = vunpack.c.l.b16 %v2243
    %v2276 = vunpack.c.l.b16 %v2244
    %v2277 = vunpack.c.l.b16 %v2245
    %v2278 = vunpack.c.l.b16 %v2246
    %v2279 = vunpack.c.l.b16 %v2247
    %v2280 = vunpack.c.l.b16 %v2248
    %v2281 = vpack.c.b16 %v2266, %v2265
    %v2282 = vpack.c.b16 %v2268, %v2267
    %v2283 = vpack.c.b16 %v2270, %v2269
    %v2284 = vpack.c.b16 %v2272, %v2271
    %v2285 = vpack.c.b16 %v2274, %v2273
    %v2286 = vpack.c.b16 %v2276, %v2275
    %v2287 = vpack.c.b16 %v2278, %v2277
    %v2288 = vpack.c.b16 %v2280, %v2279
    %2297 = vmatprep.subr.bf16.mxu0 0
    %2298 = vmatpush1.bf16.msra.mxu0 %v2281
    %2299 = vmatprep.subr.bf16.mxu0 0
    %2300 = vmatpush1.bf16.msra.mxu0 %v2282
    %2301 = vmatprep.subr.bf16.mxu0 0
    %2302 = vmatpush1.bf16.msra.mxu0 %v2283
    %2303 = vmatprep.subr.bf16.mxu0 0
    %2304 = vmatpush1.bf16.msra.mxu0 %v2284
    %2305 = vmatprep.subr.bf16.mxu0 0
    %2306 = vmatpush1.bf16.msra.mxu0 %v2285
    %2307 = vmatprep.subr.bf16.mxu0 0
    %2308 = vmatpush1.bf16.msra.mxu0 %v2286
    %2309 = vmatprep.subr.bf16.mxu0 0
    %2310 = vmatpush1.bf16.msra.mxu0 %v2287
    %2311 = vmatprep.subr.bf16.mxu0 0
    %2312 = vmatpush1.bf16.msra.mxu0 %v2288
    %2313 = vmatprep.subr.bf16.mxu0 0
    %2314 = vmatpush1.bf16.msra.mxu0 0
    %2315 = vmatprep.subr.bf16.mxu0 0
    %2316 = vmatpush1.bf16.msra.mxu0 0
    %2317 = vmatprep.subr.bf16.mxu0 0
    %2318 = vmatpush1.bf16.msra.mxu0 0
    %2319 = vmatprep.subr.bf16.mxu0 0
    %2320 = vmatpush1.bf16.msra.mxu0 0
    %2321 = vmatprep.subr.bf16.mxu0 0
    %2322 = vmatpush1.bf16.msra.mxu0 0
    %2323 = vmatprep.subr.bf16.mxu0 0
    %2324 = vmatpush1.bf16.msra.mxu0 0
    %2325 = vmatprep.subr.bf16.mxu0 0
    %2326 = vmatpush1.bf16.msra.mxu0 0
    %2327 = vmatprep.subr.bf16.mxu0 0
    %2328 = vmatpush1.bf16.msra.mxu0 0
    %2329 = vmatprep.mubr.bf16.mxu0 0
    %2330 = vmatmul.mubr.bf16.gmra.mrb[0].mxu0 %v2232
    %v2331 = vpop.f32.mrb[0].mxu0
    %v2332 = vadd.f32 0.0, %v2331
    %v2333 = vpop.f32.mrb[0].mxu0
    %v2334 = vpop.f32.mrb[0].mxu0
    %v2335 = vadd.f32 0.0, %v2334
    %v2336 = vpop.f32.mrb[0].mxu0
    %2337 = vdwg.mxu0
    %v2338 = vpack.c.bf16 %v2335, %v2332
    %v2340 = vunpack.c.l.b16 %v2338
    %v2341 = vunpack.c.h.b16 %v2338
    %v2342 = vpack.c.b16 %v2340, %v2340
    %v2343 = vpack.c.b16 %v2341, %v2341
    %2346 = vst [vmem:[#allocation13] sm:$0xf] %v2342
    %2347 = vst [vmem:[#allocation13 + $0x4] sm:$0xf] %v2343
    // Predicated region
    $region62: #{tpu_custom_call.1} parent=1 // pred_check
      _
    $region63: #{tpu_custom_call.1} parent=1 // pred_check_branch
      %2349 = sbr.rel (0) target = $region65
    $region64: #{tpu_custom_call.1} parent=1 // pred_region
      %s2351 = ssub.s32 128, 128
      %2352 = vsyncadd [#allocation4], %s2351
      %s2353 = sshll.u32 [#allocation13], 4
      %s2354 = int_to_ptr.vmem [resolvable:$true] %s2353
      %2359 = dma.vmem_to_hbm [thread:$0]  %s2354, 128, %s9, [#allocation4], 64, 64, 4
    $region65: #{tpu_custom_call.1} parent=1 // pred_fallthru
      _
    // Predicated region
    $region66: #{tpu_custom_call.1} parent=1 // pred_check
      _
    $region67: #{tpu_custom_call.1} parent=1 // pred_check_branch
      %2361 = sbr.rel (0) target = $region69
    $region68: #{tpu_custom_call.1} parent=1 // pred_region
      %2362 = dma.done [#allocation4], 128
    $region69: #{tpu_custom_call.1} parent=1 // pred_fallthru
      _
    %2363 = vsyncpa [#allocation3], 1
    %2364 = vsyncpa [#allocation6], 1
    %2365 = vsyncpa [#allocation9], 1
    %2366 = vsyncpa [#allocation12], 1
    %2367 = vsyncpa [#allocation4], 1

</llo_original>
